<compile_context>
chip_gen: v6e
topology: v6e:2x2x1
jax: 0.10.0
libtpu: 0.0.40
codegen_flags: <defaults>
</compile_context>

<pallas_src>
import functools

import jax
import jax.numpy as jnp
import numpy as np
from jax.experimental import pallas as pl
from jax.experimental.pallas import tpu as pltpu

P_BASIS = 1000   # DeepONet basis size (hard-coded as 1000 in the PyTorch module)
P_PAD = 1024     # padded to a multiple of 128 lanes / MXU N-tiles


def _round_up(x, m):
    return ((x + m - 1) // m) * m


def _num_tensorcores_per_device():
    """Best-effort detection of megacore-style devices (2 TCs behind 1 device)."""
    try:
        kind = jax.devices()[0].device_kind.lower()
    except Exception:  # pragma: no cover - defensive
        return 1
    return 2 if any(tag in kind for tag in ("v4", "v5p", "7")) else 1


def _auto_batch_tile(B):
    cores = _num_tensorcores_per_device()
    if cores >= 2 and B >= 64:
        # Give the ("parallel",) grid axis >= `cores` steps so no TC idles.
        return min(_round_up(pl.cdiv(B, cores), 8), 512)
    if B <= 512:
        return _round_up(B, 8)          # single grid step: latency path
    return 512                          # large batch: amortize per-step overhead


def deeponet_kernel(bx_ref, tx_ref, wb_ref,
                    w1_ref, b1_ref, w2_ref, b2_ref, w3_ref, b3_ref,
                    w4_ref, b4_ref, w5_ref, b5_ref, out_ref,
                    *, unroll_first_layer, branch_last):
    f32 = jnp.float32

    if not branch_last:
        # Small-tile path: wb_ref is [branch_features, P_PAD] with
        # last_layer_weights pre-folded into its columns.  Issue the branch
        # matmul first so it overlaps the trunk chain.
        branch = jnp.dot(bx_ref[...], wb_ref[...], preferred_element_type=f32)

    # Trunk net: 4 x (Linear + tanh) then Linear.  All non-MXU math in f32.
    tx = tx_ref[...].astype(f32)
    if unroll_first_layer:
        # K = trunk_features is tiny (2 here): broadcast multiply/adds on the
        # VPU beat a degenerate K=2 MXU matmul and hide under the MXU work.
        w1 = w1_ref[...]
        h = b1_ref[...].astype(f32)
        for k in range(tx.shape[1]):
            h = h + tx[:, k:k + 1] * w1[k:k + 1, :]
    else:
        h = jnp.dot(tx, w1_ref[...], preferred_element_type=f32) + b1_ref[...]
    h = jnp.tanh(h)
    h = jnp.tanh(jnp.dot(h, w2_ref[...], preferred_element_type=f32) + b2_ref[...])
    h = jnp.tanh(jnp.dot(h, w3_ref[...], preferred_element_type=f32) + b3_ref[...])
    h = jnp.tanh(jnp.dot(h, w4_ref[...], preferred_element_type=f32) + b4_ref[...])
    trunk = jnp.dot(h.astype(w5_ref.dtype), w5_ref[...],
                    preferred_element_type=f32) + b5_ref[...]        # [TB, P_PAD]

    if branch_last:
        # Large-tile restructure: wb_ref is (wb*lw)^T = [P_PAD, branch_features].
        #   out[b] = sum_f bx[b,f] * (trunk @ (wb*lw)^T)[b,f]
        # Full-depth K=1024 MXU matmul; avoids materializing [TB,1024] branch
        # and prod arrays and the [TB,1024] VPU multiply.
        m = jnp.dot(trunk.astype(wb_ref.dtype), wb_ref[...],
                    preferred_element_type=f32)                      # [TB, BF]
        prod = bx_ref[...].astype(f32) * m
    else:
        prod = branch * trunk                                        # [TB, P_PAD]

    # Final reduction over lanes on the VPU/XLU (cheap; MXU stays free).
    out_ref[...] = jnp.sum(prod, axis=1, keepdims=True)


def _prepare_params(params, use_bf16_matmuls, transpose_branch):
    wb, w1, b1, w2, b2, w3, b3, w4, b4, w5, b5, lw = params
    pad = P_PAD - P_BASIS
    # Fold last_layer_weights into the bias-free branch weight, then zero-pad
    # the basis dimension to 1024 (zero columns/rows keep the reduction exact).
    wb_scaled = jnp.pad(wb * lw, ((0, 0), (0, pad)))
    if transpose_branch:
        wb_scaled = wb_scaled.T          # [P_PAD, branch_features]
    w5_p = jnp.pad(w5, ((0, 0), (0, pad)))
    b5_p = jnp.pad(b5, ((0, 0), (0, pad)))
    if use_bf16_matmuls:
        # bf16 only at MXU operand boundaries; accumulation stays f32.
        wb_scaled = wb_scaled.astype(jnp.bfloat16)
        w5_p = w5_p.astype(jnp.bfloat16)
    return (wb_scaled, w1, b1, w2, b2, w3, b3, w4, b4, w5_p, b5_p)


def deeponet_forward(branch_input, trunk_input, params, *, batch_tile=None,
                     use_bf16_matmuls=False):
    B, branch_features = branch_input.shape
    trunk_features = trunk_input.shape[1]
    common_features = params[1].shape[1]

    if batch_tile is None:
        batch_tile = _auto_batch_tile(B)
    B_pad = _round_up(B, batch_tile)
    if B_pad != B:
        branch_input = jnp.pad(branch_input, ((0, B_pad - B), (0, 0)))
        trunk_input = jnp.pad(trunk_input, ((0, B_pad - B), (0, 0)))

    # Large tiles: push the wide reduction into the MXU (trunk-first layout).
    branch_last = batch_tile >= 128
    prepped = _prepare_params(params, use_bf16_matmuls, branch_last)
    if use_bf16_matmuls and not branch_last:
        branch_input = branch_input.astype(jnp.bfloat16)

    def bcast(arr):
        nd = arr.ndim
        return pl.BlockSpec(arr.shape, lambda i, _n=nd: (0,) * _n)

    grid = (B_pad // batch_tile,)
    in_specs = [
        pl.BlockSpec((batch_tile, branch_features), lambda i: (i, 0)),
        pl.BlockSpec((batch_tile, trunk_features), lambda i: (i, 0)),
    ] + [bcast(w) for w in prepped]
    out_specs = pl.BlockSpec((batch_tile, 1), lambda i: (i, 0))

    kernel = functools.partial(deeponet_kernel,
                               unroll_first_layer=trunk_features <= 8,
                               branch_last=branch_last)

    flops = 2 * B_pad * (branch_features * P_PAD
                         + trunk_features * common_features
                         + 3 * common_features * common_features
                         + common_features * P_PAD
                         + P_PAD)
    bytes_accessed = int(
        branch_input.size * branch_input.dtype.itemsize
        + trunk_input.size * trunk_input.dtype.itemsize
        + sum(int(p.size) * p.dtype.itemsize for p in prepped)
        + B_pad * 4)
    cost = pl.CostEstimate(flops=int(flops),
                           transcendentals=int(4 * B_pad * common_features),
                           bytes_accessed=bytes_accessed)

    out = pl.pallas_call(
        kernel,
        out_shape=jax.ShapeDtypeStruct((B_pad, 1), jnp.float32),
        grid_spec=pltpu.PrefetchScalarGridSpec(
            num_scalar_prefetch=0,
            grid=grid,
            in_specs=in_specs,
            out_specs=out_specs,
        ),
        compiler_params=pltpu.CompilerParams(
            dimension_semantics=("parallel",)),
        cost_estimate=cost,
    )(branch_input, trunk_input, *prepped)
    return out[:B]


def deeponet_reference(branch_input, trunk_input, params):
    wb, w1, b1, w2, b2, w3, b3, w4, b4, w5, b5, lw = params
    branch = branch_input @ wb
    h = jnp.tanh(trunk_input @ w1 + b1)
    h = jnp.tanh(h @ w2 + b2)
    h = jnp.tanh(h @ w3 + b3)
    h = jnp.tanh(h @ w4 + b4)
    trunk = h @ w5 + b5
    return jnp.sum(branch * trunk * lw, axis=1, keepdims=True)


def make_params(key, branch_features, trunk_features, common_features):
    """Deterministic synthetic parameters (weights as [in, out], biases [1, out])."""
    ks = jax.random.split(key, 12)

    def lin(k, fan_in, fan_out, scale=0.1):
        return jax.random.normal(k, (fan_in, fan_out), jnp.float32) * scale

    wb = lin(ks[0], branch_features, P_BASIS)
    w1 = lin(ks[1], trunk_features, common_features)
    b1 = jax.random.normal(ks[2], (1, common_features), jnp.float32) * 0.05
    w2 = lin(ks[3], common_features, common_features)
    b2 = jax.random.normal(ks[4], (1, common_features), jnp.float32) * 0.05
    w3 = lin(ks[5], common_features, common_features)
    b3 = jax.random.normal(ks[6], (1, common_features), jnp.float32) * 0.05
    w4 = lin(ks[7], common_features, common_features)
    b4 = jax.random.normal(ks[8], (1, common_features), jnp.float32) * 0.05
    w5 = lin(ks[9], common_features, P_BASIS)
    b5 = jax.random.normal(ks[10], (1, P_BASIS), jnp.float32) * 0.05
    lw = jax.random.normal(ks[11], (1, P_BASIS), jnp.float32)  # last_layer_weights
    return (wb, w1, b1, w2, b2, w3, b3, w4, b4, w5, b5, lw)


if __name__ == "__main__":
    # Small shapes consistent with the module: branch input = sensor values,
    # trunk input = 2-D query coordinates (Laplace 2D circle problem).
    branch_features = 64   # number of sensors
    trunk_features = 2     # (x, y) coordinates
    common_features = 32

    key = jax.random.PRNGKey(0)
    k_b, k_t, k_p, k_b2, k_t2 = jax.random.split(key, 5)
    params = make_params(k_p, branch_features, trunk_features, common_features)

    # 1) Small batch -> single-tile latency path (branch matmul overlaps trunk).
    batch = 16
    bx = jax.random.normal(k_b, (batch, branch_features), jnp.float32)
    tx = jax.random.normal(k_t, (batch, trunk_features), jnp.float32)
    out = jax.block_until_ready(deeponet_forward(bx, tx, params))
    ref = jax.block_until_ready(deeponet_reference(bx, tx, params))
    np.testing.assert_allclose(np.asarray(out), np.asarray(ref),
                               rtol=1e-3, atol=1e-3)

    # 2) Larger batch with an explicit >=128 tile -> restructured (trunk-first)
    #    path, also exercises batch zero-padding (150 -> 152 rows).
    batch2 = 150
    bx2 = jax.random.normal(k_b2, (batch2, branch_features), jnp.float32)
    tx2 = jax.random.normal(k_t2, (batch2, trunk_features), jnp.float32)
    out2 = jax.block_until_ready(
        deeponet_forward(bx2, tx2, params, batch_tile=152))
    ref2 = jax.block_until_ready(deeponet_reference(bx2, tx2, params))
    np.testing.assert_allclose(np.asarray(out2), np.asarray(ref2),
                               rtol=1e-3, atol=1e-3)

    # NOTE: set use_bf16_matmuls=True on v6e/v7x when ~1e-2 relative error is
    # acceptable; f32 default keeps the exact semantics of the PyTorch module.
    print("KERNEL_OK")
</pallas_src>

<mosaic_0001>
module attributes {stable_mosaic.version = 11 : i64} {
  func.func @deeponet_kernel(%arg0: i32, %arg1: memref<16x64xf32, #tpu.memory_space<vmem>>, %arg2: memref<16x2xf32, #tpu.memory_space<vmem>>, %arg3: memref<64x1024xf32, #tpu.memory_space<vmem>>, %arg4: memref<2x32xf32, #tpu.memory_space<vmem>>, %arg5: memref<1x32xf32, #tpu.memory_space<vmem>>, %arg6: memref<32x32xf32, #tpu.memory_space<vmem>>, %arg7: memref<1x32xf32, #tpu.memory_space<vmem>>, %arg8: memref<32x32xf32, #tpu.memory_space<vmem>>, %arg9: memref<1x32xf32, #tpu.memory_space<vmem>>, %arg10: memref<32x32xf32, #tpu.memory_space<vmem>>, %arg11: memref<1x32xf32, #tpu.memory_space<vmem>>, %arg12: memref<32x1024xf32, #tpu.memory_space<vmem>>, %arg13: memref<1x1024xf32, #tpu.memory_space<vmem>>, %arg14: memref<16x1xf32, #tpu.memory_space<vmem>>) attributes {dimension_semantics = [#tpu.dimension_semantics<parallel>], iteration_bounds = array<i64: 1>, scalar_prefetch = 0 : i64, scratch_operands = 0 : i64, tpu.core_type = #tpu.core_type<tc>, window_params = [{transform_indices = @transform_0, window_bounds = array<i64: 16, 64>}, {transform_indices = @transform_1, window_bounds = array<i64: 16, 2>}, {pipeline_mode = #tpu.pipeline_mode<synchronous>, transform_indices = @transform_2, window_bounds = array<i64: 64, 1024>}, {pipeline_mode = #tpu.pipeline_mode<synchronous>, transform_indices = @transform_3, window_bounds = array<i64: 2, 32>}, {pipeline_mode = #tpu.pipeline_mode<synchronous>, transform_indices = @transform_4, window_bounds = array<i64: 1, 32>}, {pipeline_mode = #tpu.pipeline_mode<synchronous>, transform_indices = @transform_5, window_bounds = array<i64: 32, 32>}, {pipeline_mode = #tpu.pipeline_mode<synchronous>, transform_indices = @transform_6, window_bounds = array<i64: 1, 32>}, {pipeline_mode = #tpu.pipeline_mode<synchronous>, transform_indices = @transform_7, window_bounds = array<i64: 32, 32>}, {pipeline_mode = #tpu.pipeline_mode<synchronous>, transform_indices = @transform_8, window_bounds = array<i64: 1, 32>}, {pipeline_mode = #tpu.pipeline_mode<synchronous>, transform_indices = @transform_9, window_bounds = array<i64: 32, 32>}, {pipeline_mode = #tpu.pipeline_mode<synchronous>, transform_indices = @transform_10, window_bounds = array<i64: 1, 32>}, {pipeline_mode = #tpu.pipeline_mode<synchronous>, transform_indices = @transform_11, window_bounds = array<i64: 32, 1024>}, {pipeline_mode = #tpu.pipeline_mode<synchronous>, transform_indices = @transform_12, window_bounds = array<i64: 1, 1024>}, {transform_indices = @transform_13, window_bounds = array<i64: 16, 1>}]} {
    %c0 = arith.constant 0 : index
    %c0_0 = arith.constant 0 : index
    %0 = vector.load %arg1[%c0, %c0_0] : memref<16x64xf32, #tpu.memory_space<vmem>>, vector<16x64xf32>
    %c0_1 = arith.constant 0 : index
    %c0_2 = arith.constant 0 : index
    %1 = vector.load %arg3[%c0_1, %c0_2] : memref<64x1024xf32, #tpu.memory_space<vmem>>, vector<64x1024xf32>
    %cst = arith.constant dense<0.000000e+00> : vector<16x1024xf32>
    %2 = tpu.matmul %0, %1, %cst {dimension_numbers = #tpu.dot_dimension_numbers<[1], [0], [0], [1], [0, 0, 1, 1], [], []>} : vector<16x64xf32>, vector<64x1024xf32>, vector<16x1024xf32> -> vector<16x1024xf32>
    %c0_3 = arith.constant 0 : index
    %c0_4 = arith.constant 0 : index
    %3 = vector.load %arg2[%c0_3, %c0_4] : memref<16x2xf32, #tpu.memory_space<vmem>>, vector<16x2xf32>
    %c0_5 = arith.constant 0 : index
    %c0_6 = arith.constant 0 : index
    %4 = vector.load %arg4[%c0_5, %c0_6] : memref<2x32xf32, #tpu.memory_space<vmem>>, vector<2x32xf32>
    %c0_7 = arith.constant 0 : index
    %c0_8 = arith.constant 0 : index
    %5 = vector.load %arg5[%c0_7, %c0_8] : memref<1x32xf32, #tpu.memory_space<vmem>>, vector<1x32xf32>
    %6 = vector.extract_strided_slice %3 {offsets = [0, 0], sizes = [16, 1], strides = [1, 1]} : vector<16x2xf32> to vector<16x1xf32>
    %7 = vector.extract_strided_slice %4 {offsets = [0, 0], sizes = [1, 32], strides = [1, 1]} : vector<2x32xf32> to vector<1x32xf32>
    %8 = vector.broadcast %6 : vector<16x1xf32> to vector<16x32xf32>
    %9 = vector.broadcast %7 : vector<1x32xf32> to vector<16x32xf32>
    %10 = arith.mulf %8, %9 : vector<16x32xf32>
    %11 = vector.broadcast %5 : vector<1x32xf32> to vector<16x32xf32>
    %12 = arith.addf %11, %10 : vector<16x32xf32>
    %13 = vector.extract_strided_slice %3 {offsets = [0, 1], sizes = [16, 1], strides = [1, 1]} : vector<16x2xf32> to vector<16x1xf32>
    %14 = vector.extract_strided_slice %4 {offsets = [1, 0], sizes = [1, 32], strides = [1, 1]} : vector<2x32xf32> to vector<1x32xf32>
    %15 = vector.broadcast %13 : vector<16x1xf32> to vector<16x32xf32>
    %16 = vector.broadcast %14 : vector<1x32xf32> to vector<16x32xf32>
    %17 = arith.mulf %15, %16 : vector<16x32xf32>
    %18 = arith.addf %12, %17 : vector<16x32xf32>
    %19 = math.tanh %18 : vector<16x32xf32>
    %c0_9 = arith.constant 0 : index
    %c0_10 = arith.constant 0 : index
    %20 = vector.load %arg6[%c0_9, %c0_10] : memref<32x32xf32, #tpu.memory_space<vmem>>, vector<32x32xf32>
    %cst_11 = arith.constant dense<0.000000e+00> : vector<16x32xf32>
    %21 = tpu.matmul %19, %20, %cst_11 {dimension_numbers = #tpu.dot_dimension_numbers<[1], [0], [0], [1], [0, 0, 1, 1], [], []>} : vector<16x32xf32>, vector<32x32xf32>, vector<16x32xf32> -> vector<16x32xf32>
    %c0_12 = arith.constant 0 : index
    %c0_13 = arith.constant 0 : index
    %22 = vector.load %arg7[%c0_12, %c0_13] : memref<1x32xf32, #tpu.memory_space<vmem>>, vector<1x32xf32>
    %23 = vector.broadcast %22 : vector<1x32xf32> to vector<16x32xf32>
    %24 = arith.addf %21, %23 : vector<16x32xf32>
    %25 = math.tanh %24 : vector<16x32xf32>
    %c0_14 = arith.constant 0 : index
    %c0_15 = arith.constant 0 : index
    %26 = vector.load %arg8[%c0_14, %c0_15] : memref<32x32xf32, #tpu.memory_space<vmem>>, vector<32x32xf32>
    %cst_16 = arith.constant dense<0.000000e+00> : vector<16x32xf32>
    %27 = tpu.matmul %25, %26, %cst_16 {dimension_numbers = #tpu.dot_dimension_numbers<[1], [0], [0], [1], [0, 0, 1, 1], [], []>} : vector<16x32xf32>, vector<32x32xf32>, vector<16x32xf32> -> vector<16x32xf32>
    %c0_17 = arith.constant 0 : index
    %c0_18 = arith.constant 0 : index
    %28 = vector.load %arg9[%c0_17, %c0_18] : memref<1x32xf32, #tpu.memory_space<vmem>>, vector<1x32xf32>
    %29 = vector.broadcast %28 : vector<1x32xf32> to vector<16x32xf32>
    %30 = arith.addf %27, %29 : vector<16x32xf32>
    %31 = math.tanh %30 : vector<16x32xf32>
    %c0_19 = arith.constant 0 : index
    %c0_20 = arith.constant 0 : index
    %32 = vector.load %arg10[%c0_19, %c0_20] : memref<32x32xf32, #tpu.memory_space<vmem>>, vector<32x32xf32>
    %cst_21 = arith.constant dense<0.000000e+00> : vector<16x32xf32>
    %33 = tpu.matmul %31, %32, %cst_21 {dimension_numbers = #tpu.dot_dimension_numbers<[1], [0], [0], [1], [0, 0, 1, 1], [], []>} : vector<16x32xf32>, vector<32x32xf32>, vector<16x32xf32> -> vector<16x32xf32>
    %c0_22 = arith.constant 0 : index
    %c0_23 = arith.constant 0 : index
    %34 = vector.load %arg11[%c0_22, %c0_23] : memref<1x32xf32, #tpu.memory_space<vmem>>, vector<1x32xf32>
    %35 = vector.broadcast %34 : vector<1x32xf32> to vector<16x32xf32>
    %36 = arith.addf %33, %35 : vector<16x32xf32>
    %37 = math.tanh %36 : vector<16x32xf32>
    %c0_24 = arith.constant 0 : index
    %c0_25 = arith.constant 0 : index
    %38 = vector.load %arg12[%c0_24, %c0_25] : memref<32x1024xf32, #tpu.memory_space<vmem>>, vector<32x1024xf32>
    %cst_26 = arith.constant dense<0.000000e+00> : vector<16x1024xf32>
    %39 = tpu.matmul %37, %38, %cst_26 {dimension_numbers = #tpu.dot_dimension_numbers<[1], [0], [0], [1], [0, 0, 1, 1], [], []>} : vector<16x32xf32>, vector<32x1024xf32>, vector<16x1024xf32> -> vector<16x1024xf32>
    %c0_27 = arith.constant 0 : index
    %c0_28 = arith.constant 0 : index
    %40 = vector.load %arg13[%c0_27, %c0_28] : memref<1x1024xf32, #tpu.memory_space<vmem>>, vector<1x1024xf32>
    %41 = vector.broadcast %40 : vector<1x1024xf32> to vector<16x1024xf32>
    %42 = arith.addf %39, %41 : vector<16x1024xf32>
    %43 = arith.mulf %2, %42 : vector<16x1024xf32>
    %cst_29 = arith.constant dense<0.000000e+00> : vector<16xf32>
    %44 = vector.multi_reduction <add>, %43, %cst_29 [1] : vector<16x1024xf32> to vector<16xf32>
    %45 = vector.shape_cast %44 : vector<16xf32> to vector<16x1xf32>
    %c0_30 = arith.constant 0 : index
    %c0_31 = arith.constant 0 : index
    %46 = vector.load %arg14[%c0_30, %c0_31] : memref<16x1xf32, #tpu.memory_space<vmem>>, vector<16x1xf32>
    tpu.vector_store %arg14[%c0_30, %c0_31], %45 {strides = array<i32>} : memref<16x1xf32, #tpu.memory_space<vmem>>, vector<16x1xf32>,
    return
  }
  func.func @transform_0(%arg0: i32) -> (i32, i32) {
    %c0_i32 = arith.constant 0 : i32
    %c0_i32_0 = arith.constant 0 : i32
    return %arg0, %c0_i32 : i32, i32
  }
  func.func @transform_1(%arg0: i32) -> (i32, i32) {
    %c0_i32 = arith.constant 0 : i32
    %c0_i32_0 = arith.constant 0 : i32
    return %arg0, %c0_i32 : i32, i32
  }
  func.func @transform_2(%arg0: i32) -> (i32, i32) {
    %c0_i32 = arith.constant 0 : i32
    %c0_i32_0 = arith.constant 0 : i32
    %c0_i32_1 = arith.constant 0 : i32
    return %c0_i32, %c0_i32_0 : i32, i32
  }
  func.func @transform_3(%arg0: i32) -> (i32, i32) {
    %c0_i32 = arith.constant 0 : i32
    %c0_i32_0 = arith.constant 0 : i32
    %c0_i32_1 = arith.constant 0 : i32
    return %c0_i32, %c0_i32_0 : i32, i32
  }
  func.func @transform_4(%arg0: i32) -> (i32, i32) {
    %c0_i32 = arith.constant 0 : i32
    %c0_i32_0 = arith.constant 0 : i32
    %c0_i32_1 = arith.constant 0 : i32
    return %c0_i32, %c0_i32_0 : i32, i32
  }
  func.func @transform_5(%arg0: i32) -> (i32, i32) {
    %c0_i32 = arith.constant 0 : i32
    %c0_i32_0 = arith.constant 0 : i32
    %c0_i32_1 = arith.constant 0 : i32
    return %c0_i32, %c0_i32_0 : i32, i32
  }
  func.func @transform_6(%arg0: i32) -> (i32, i32) {
    %c0_i32 = arith.constant 0 : i32
    %c0_i32_0 = arith.constant 0 : i32
    %c0_i32_1 = arith.constant 0 : i32
    return %c0_i32, %c0_i32_0 : i32, i32
  }
  func.func @transform_7(%arg0: i32) -> (i32, i32) {
    %c0_i32 = arith.constant 0 : i32
    %c0_i32_0 = arith.constant 0 : i32
    %c0_i32_1 = arith.constant 0 : i32
    return %c0_i32, %c0_i32_0 : i32, i32
  }
  func.func @transform_8(%arg0: i32) -> (i32, i32) {
    %c0_i32 = arith.constant 0 : i32
    %c0_i32_0 = arith.constant 0 : i32
    %c0_i32_1 = arith.constant 0 : i32
    return %c0_i32, %c0_i32_0 : i32, i32
  }
  func.func @transform_9(%arg0: i32) -> (i32, i32) {
    %c0_i32 = arith.constant 0 : i32
    %c0_i32_0 = arith.constant 0 : i32
    %c0_i32_1 = arith.constant 0 : i32
    return %c0_i32, %c0_i32_0 : i32, i32
  }
  func.func @transform_10(%arg0: i32) -> (i32, i32) {
    %c0_i32 = arith.constant 0 : i32
    %c0_i32_0 = arith.constant 0 : i32
    %c0_i32_1 = arith.constant 0 : i32
    return %c0_i32, %c0_i32_0 : i32, i32
  }
  func.func @transform_11(%arg0: i32) -> (i32, i32) {
    %c0_i32 = arith.constant 0 : i32
    %c0_i32_0 = arith.constant 0 : i32
    %c0_i32_1 = arith.constant 0 : i32
    return %c0_i32, %c0_i32_0 : i32, i32
  }
  func.func @transform_12(%arg0: i32) -> (i32, i32) {
    %c0_i32 = arith.constant 0 : i32
    %c0_i32_0 = arith.constant 0 : i32
    %c0_i32_1 = arith.constant 0 : i32
    return %c0_i32, %c0_i32_0 : i32, i32
  }
  func.func @transform_13(%arg0: i32) -> (i32, i32) {
    %c0_i32 = arith.constant 0 : i32
    %c0_i32_0 = arith.constant 0 : i32
    return %arg0, %c0_i32 : i32, i32
  }
}

</mosaic_0001>

<llo_original>
// kernel: tpu_custom_call.1
$region0: #{tpu_custom_call.1}
  #allocation0 [shape = 'u32[]', space=smem, size = 0x4, offset = 0x4, fixed_abs, tag = 'smem constant byte address 0x4 - core index']
  #allocation1 [shape = 'u32[144,128]{1,0:T(1,128)}', space=vmem, size = 0x12000, scoped, tag = 'internal scratch']
  %s0 = inlined_call_operand.hbm [shape: f32[16,64], index: 0, kind: input, shape index: {}]
  %s1 = inlined_call_operand.vmem [shape: f32[16,2], index: 1, kind: input, shape index: {}]
  %s2 = inlined_call_operand.hbm [shape: f32[64,1024], index: 2, kind: input, shape index: {}]
  %s3 = inlined_call_operand.vmem [shape: f32[2,32], index: 3, kind: input, shape index: {}]
  %s4 = inlined_call_operand.hbm [shape: f32[1,32], index: 4, kind: input, shape index: {}]
  %s5 = inlined_call_operand.hbm [shape: f32[32,32], index: 5, kind: input, shape index: {}]
  %s6 = inlined_call_operand.hbm [shape: f32[1,32], index: 6, kind: input, shape index: {}]
  %s7 = inlined_call_operand.hbm [shape: f32[32,32], index: 7, kind: input, shape index: {}]
  %s8 = inlined_call_operand.hbm [shape: f32[1,32], index: 8, kind: input, shape index: {}]
  %s9 = inlined_call_operand.vmem [shape: f32[32,32], index: 9, kind: input, shape index: {}]
  %s10 = inlined_call_operand.vmem [shape: f32[1,32], index: 10, kind: input, shape index: {}]
  %s11 = inlined_call_operand.hbm [shape: f32[32,1024], index: 11, kind: input, shape index: {}]
  %s12 = inlined_call_operand.hbm [shape: f32[1,1024], index: 12, kind: input, shape index: {}]
  %s13 = inlined_call_operand.vmem [shape: f32[16,1], index: 13, kind: output, shape index: {}]
  %s14 = sld [smem:[#allocation0]]
  $region98: #{tpu_custom_call.1} parent=0
    _
  %s16 = ssub.s32 1, %s14
  %s17 = scalar_select 0, %s16, %s14
  $region1: #{tpu_custom_call.1} parent=0
    #allocation2 [shape = 'u8[8192]{0}', space=vmem, size = 0x2000, scoped, tag = 'input window, operand 0, single buffered']
    #allocation3 [shape = 's32[1]{0}', space=sflag, size = 0x4, scoped, tag = 'scoped memory for tpu_custom_call.1']
    #allocation4 [shape = 'u8[262144]{0}', space=vmem, size = 0x40000, scoped, tag = 'input window, operand 2, single buffered']
    #allocation5 [shape = 's32[1]{0}', space=sflag, size = 0x4, scoped, tag = 'scoped memory for tpu_custom_call.1']
    #allocation6 [shape = 'u8[512]{0}', space=vmem, size = 0x400, scoped, tag = 'input window, operand 4, single buffered']
    #allocation7 [shape = 'u8[16384]{0}', space=vmem, size = 0x4000, scoped, tag = 'input window, operand 5, single buffered']
    #allocation8 [shape = 's32[1]{0}', space=sflag, size = 0x4, scoped, tag = 'scoped memory for tpu_custom_call.1']
    #allocation9 [shape = 'u8[512]{0}', space=vmem, size = 0x400, scoped, tag = 'input window, operand 6, single buffered']
    #allocation10 [shape = 'u8[16384]{0}', space=vmem, size = 0x4000, scoped, tag = 'input window, operand 7, single buffered']
    #allocation11 [shape = 's32[1]{0}', space=sflag, size = 0x4, scoped, tag = 'scoped memory for tpu_custom_call.1']
    #allocation12 [shape = 'u8[512]{0}', space=vmem, size = 0x400, scoped, tag = 'input window, operand 8, single buffered']
    #allocation13 [shape = 'u8[131072]{0}', space=vmem, size = 0x20000, scoped, tag = 'input window, operand 11, single buffered']
    #allocation14 [shape = 's32[1]{0}', space=sflag, size = 0x4, scoped, tag = 'scoped memory for tpu_custom_call.1']
    #allocation15 [shape = 'u8[4096]{0}', space=vmem, size = 0x1000, scoped, tag = 'input window, operand 12, single buffered']
    %18 = vsyncpa [#allocation3], 0
    %19 = vsyncpa [#allocation5], 0
    %20 = vsyncpa [#allocation8], 0
    %21 = vsyncpa [#allocation11], 0
    %22 = vsyncpa [#allocation14], 0
    // Predicated region
    $region2: #{tpu_custom_call.1} parent=1 // pred_check
      _
    $region3: #{tpu_custom_call.1} parent=1 // pred_check_branch
      %24 = sbr.rel (0) target = $region5
    $region4: #{tpu_custom_call.1} parent=1 // pred_region
      %s26 = ssub.s32 256, 256
      %27 = vsyncadd [#allocation3], %s26
      %s28 = sshll.u32 [#allocation2], 4
      %s29 = int_to_ptr.vmem [resolvable:$true] %s28
      %34 = dma.hbm_to_vmem [thread:$0]  %s0, 256, %s29, [#allocation3], 128, 128, 8
    $region5: #{tpu_custom_call.1} parent=1 // pred_fallthru
      _
    // Predicated region
    $region6: #{tpu_custom_call.1} parent=1 // pred_check
      _
    $region7: #{tpu_custom_call.1} parent=1 // pred_check_branch
      %36 = sbr.rel (0) target = $region9
    $region8: #{tpu_custom_call.1} parent=1 // pred_region
      _
    $region9: #{tpu_custom_call.1} parent=1 // pred_fallthru
      _
    // Predicated region
    $region10: #{tpu_custom_call.1} parent=1 // pred_check
      _
    $region11: #{tpu_custom_call.1} parent=1 // pred_check_branch
      %38 = sbr.rel (0) target = $region13
    $region12: #{tpu_custom_call.1} parent=1 // pred_region
      %s40 = ssub.s32 8192, 8192
      %41 = vsyncadd [#allocation5], %s40
      %s42 = sshll.u32 [#allocation4], 4
      %s43 = int_to_ptr.vmem [resolvable:$true] %s42
      %48 = dma.hbm_to_vmem [thread:$0]  %s2, 8192, %s43, [#allocation5], 1024, 1024, 64
    $region13: #{tpu_custom_call.1} parent=1 // pred_fallthru
      _
    // Predicated region
    $region14: #{tpu_custom_call.1} parent=1 // pred_check
      _
    $region15: #{tpu_custom_call.1} parent=1 // pred_check_branch
      %50 = sbr.rel (0) target = $region17
    $region16: #{tpu_custom_call.1} parent=1 // pred_region
      _
    $region17: #{tpu_custom_call.1} parent=1 // pred_fallthru
      _
    // Predicated region
    $region18: #{tpu_custom_call.1} parent=1 // pred_check
      _
    $region19: #{tpu_custom_call.1} parent=1 // pred_check_branch
      %52 = sbr.rel (0) target = $region21
    $region20: #{tpu_custom_call.1} parent=1 // pred_region
      %s54 = ssub.s32 16, 16
      %55 = vsyncadd [#allocation5], %s54
      %s57 = sshll.u32 [#allocation6], 4
      %s58 = int_to_ptr.vmem [resolvable:$true] %s57
      %60 = dma.hbm_to_vmem [thread:$0]  %s4, 16, %s58, [#allocation5]
    $region21: #{tpu_custom_call.1} parent=1 // pred_fallthru
      _
    // Predicated region
    $region22: #{tpu_custom_call.1} parent=1 // pred_check
      _
    $region23: #{tpu_custom_call.1} parent=1 // pred_check_branch
      %62 = sbr.rel (0) target = $region25
    $region24: #{tpu_custom_call.1} parent=1 // pred_region
      %s64 = ssub.s32 512, 512
      %65 = vsyncadd [#allocation8], %s64
      %s66 = sshll.u32 [#allocation7], 4
      %s67 = int_to_ptr.vmem [resolvable:$true] %s66
      %72 = dma.hbm_to_vmem [thread:$0]  %s5, 512, %s67, [#allocation8], 128, 128, 8
    $region25: #{tpu_custom_call.1} parent=1 // pred_fallthru
      _
    // Predicated region
    $region26: #{tpu_custom_call.1} parent=1 // pred_check
      _
    $region27: #{tpu_custom_call.1} parent=1 // pred_check_branch
      %74 = sbr.rel (0) target = $region29
    $region28: #{tpu_custom_call.1} parent=1 // pred_region
      %s76 = ssub.s32 16, 16
      %77 = vsyncadd [#allocation8], %s76
      %s79 = sshll.u32 [#allocation9], 4
      %s80 = int_to_ptr.vmem [resolvable:$true] %s79
      %82 = dma.hbm_to_vmem [thread:$0]  %s6, 16, %s80, [#allocation8]
    $region29: #{tpu_custom_call.1} parent=1 // pred_fallthru
      _
    // Predicated region
    $region30: #{tpu_custom_call.1} parent=1 // pred_check
      _
    $region31: #{tpu_custom_call.1} parent=1 // pred_check_branch
      %84 = sbr.rel (0) target = $region33
    $region32: #{tpu_custom_call.1} parent=1 // pred_region
      %s86 = ssub.s32 512, 512
      %87 = vsyncadd [#allocation11], %s86
      %s88 = sshll.u32 [#allocation10], 4
      %s89 = int_to_ptr.vmem [resolvable:$true] %s88
      %94 = dma.hbm_to_vmem [thread:$0]  %s7, 512, %s89, [#allocation11], 128, 128, 8
    $region33: #{tpu_custom_call.1} parent=1 // pred_fallthru
      _
    // Predicated region
    $region34: #{tpu_custom_call.1} parent=1 // pred_check
      _
    $region35: #{tpu_custom_call.1} parent=1 // pred_check_branch
      %96 = sbr.rel (0) target = $region37
    $region36: #{tpu_custom_call.1} parent=1 // pred_region
      %s98 = ssub.s32 16, 16
      %99 = vsyncadd [#allocation11], %s98
      %s101 = sshll.u32 [#allocation12], 4
      %s102 = int_to_ptr.vmem [resolvable:$true] %s101
      %104 = dma.hbm_to_vmem [thread:$0]  %s8, 16, %s102, [#allocation11]
    $region37: #{tpu_custom_call.1} parent=1 // pred_fallthru
      _
    // Predicated region
    $region38: #{tpu_custom_call.1} parent=1 // pred_check
      _
    $region39: #{tpu_custom_call.1} parent=1 // pred_check_branch
      %106 = sbr.rel (0) target = $region41
    $region40: #{tpu_custom_call.1} parent=1 // pred_region
      _
    $region41: #{tpu_custom_call.1} parent=1 // pred_fallthru
      _
    // Predicated region
    $region42: #{tpu_custom_call.1} parent=1 // pred_check
      _
    $region43: #{tpu_custom_call.1} parent=1 // pred_check_branch
      %108 = sbr.rel (0) target = $region45
    $region44: #{tpu_custom_call.1} parent=1 // pred_region
      _
    $region45: #{tpu_custom_call.1} parent=1 // pred_fallthru
      _
    // Predicated region
    $region46: #{tpu_custom_call.1} parent=1 // pred_check
      _
    $region47: #{tpu_custom_call.1} parent=1 // pred_check_branch
      %110 = sbr.rel (0) target = $region49
    $region48: #{tpu_custom_call.1} parent=1 // pred_region
      %s112 = ssub.s32 4096, 4096
      %113 = vsyncadd [#allocation14], %s112
      %s114 = sshll.u32 [#allocation13], 4
      %s115 = int_to_ptr.vmem [resolvable:$true] %s114
      %120 = dma.hbm_to_vmem [thread:$0]  %s11, 4096, %s115, [#allocation14], 1024, 1024, 64
    $region49: #{tpu_custom_call.1} parent=1 // pred_fallthru
      _
    // Predicated region
    $region50: #{tpu_custom_call.1} parent=1 // pred_check
      _
    $region51: #{tpu_custom_call.1} parent=1 // pred_check_branch
      %122 = sbr.rel (0) target = $region53
    $region52: #{tpu_custom_call.1} parent=1 // pred_region
      %s124 = ssub.s32 128, 128
      %125 = vsyncadd [#allocation14], %s124
      %s127 = sshll.u32 [#allocation15], 4
      %s128 = int_to_ptr.vmem [resolvable:$true] %s127
      %130 = dma.hbm_to_vmem [thread:$0]  %s12, 128, %s128, [#allocation14]
    $region53: #{tpu_custom_call.1} parent=1 // pred_fallthru
      _
    // Predicated region
    $region54: #{tpu_custom_call.1} parent=1 // pred_check
      _
    $region55: #{tpu_custom_call.1} parent=1 // pred_check_branch
      %132 = sbr.rel (0) target = $region57
    $region56: #{tpu_custom_call.1} parent=1 // pred_region
      %133 = dma.done [#allocation3], 256
    $region57: #{tpu_custom_call.1} parent=1 // pred_fallthru
      _
    // Predicated region
    $region58: #{tpu_custom_call.1} parent=1 // pred_check
      _
    $region59: #{tpu_custom_call.1} parent=1 // pred_check_branch
      %135 = sbr.rel (0) target = $region61
    $region60: #{tpu_custom_call.1} parent=1 // pred_region
      %136 = dma.done [#allocation5], 8192
    $region61: #{tpu_custom_call.1} parent=1 // pred_fallthru
      _
    // Predicated region
    $region62: #{tpu_custom_call.1} parent=1 // pred_check
      _
    $region63: #{tpu_custom_call.1} parent=1 // pred_check_branch
      %138 = sbr.rel (0) target = $region65
    $region64: #{tpu_custom_call.1} parent=1 // pred_region
      %139 = dma.done [#allocation5], 16
    $region65: #{tpu_custom_call.1} parent=1 // pred_fallthru
      _
    // Predicated region
    $region66: #{tpu_custom_call.1} parent=1 // pred_check
      _
    $region67: #{tpu_custom_call.1} parent=1 // pred_check_branch
      %141 = sbr.rel (0) target = $region69
    $region68: #{tpu_custom_call.1} parent=1 // pred_region
      %142 = dma.done [#allocation8], 512
    $region69: #{tpu_custom_call.1} parent=1 // pred_fallthru
      _
    // Predicated region
    $region70: #{tpu_custom_call.1} parent=1 // pred_check
      _
    $region71: #{tpu_custom_call.1} parent=1 // pred_check_branch
      %144 = sbr.rel (0) target = $region73
    $region72: #{tpu_custom_call.1} parent=1 // pred_region
      %145 = dma.done [#allocation8], 16
    $region73: #{tpu_custom_call.1} parent=1 // pred_fallthru
      _
    // Predicated region
    $region74: #{tpu_custom_call.1} parent=1 // pred_check
      _
    $region75: #{tpu_custom_call.1} parent=1 // pred_check_branch
      %147 = sbr.rel (0) target = $region77
    $region76: #{tpu_custom_call.1} parent=1 // pred_region
      %148 = dma.done [#allocation11], 512
    $region77: #{tpu_custom_call.1} parent=1 // pred_fallthru
      _
    // Predicated region
    $region78: #{tpu_custom_call.1} parent=1 // pred_check
      _
    $region79: #{tpu_custom_call.1} parent=1 // pred_check_branch
      %150 = sbr.rel (0) target = $region81
    $region80: #{tpu_custom_call.1} parent=1 // pred_region
      %151 = dma.done [#allocation11], 16
    $region81: #{tpu_custom_call.1} parent=1 // pred_fallthru
      _
    // Predicated region
    $region82: #{tpu_custom_call.1} parent=1 // pred_check
      _
    $region83: #{tpu_custom_call.1} parent=1 // pred_check_branch
      %153 = sbr.rel (0) target = $region85
    $region84: #{tpu_custom_call.1} parent=1 // pred_region
      %154 = dma.done [#allocation14], 4096
    $region85: #{tpu_custom_call.1} parent=1 // pred_fallthru
      _
    // Predicated region
    $region86: #{tpu_custom_call.1} parent=1 // pred_check
      _
    $region87: #{tpu_custom_call.1} parent=1 // pred_check_branch
      %156 = sbr.rel (0) target = $region89
    $region88: #{tpu_custom_call.1} parent=1 // pred_region
      %157 = dma.done [#allocation14], 128
    $region89: #{tpu_custom_call.1} parent=1 // pred_fallthru
      _
    %v158 = vld [vmem:[#allocation2] sm:$0xff]
    %v159 = vld [vmem:[#allocation2 + $0x8] sm:$0xff]
    %v160 = vld [vmem:[#allocation4] sm:$0xff]
    %v161 = vld [vmem:[#allocation4 + $0x8] sm:$0xff]
    %v162 = vld [vmem:[#allocation4 + $0x10] sm:$0xff]
    %v163 = vld [vmem:[#allocation4 + $0x18] sm:$0xff]
    %v164 = vld [vmem:[#allocation4 + $0x20] sm:$0xff]
    %v165 = vld [vmem:[#allocation4 + $0x28] sm:$0xff]
    %v166 = vld [vmem:[#allocation4 + $0x30] sm:$0xff]
    %v167 = vld [vmem:[#allocation4 + $0x38] sm:$0xff]
    %v168 = vld [vmem:[#allocation4 + $0x40] sm:$0xff]
    %v169 = vld [vmem:[#allocation4 + $0x48] sm:$0xff]
    %v170 = vld [vmem:[#allocation4 + $0x50] sm:$0xff]
    %v171 = vld [vmem:[#allocation4 + $0x58] sm:$0xff]
    %v172 = vld [vmem:[#allocation4 + $0x60] sm:$0xff]
    %v173 = vld [vmem:[#allocation4 + $0x68] sm:$0xff]
    %v174 = vld [vmem:[#allocation4 + $0x70] sm:$0xff]
    %v175 = vld [vmem:[#allocation4 + $0x78] sm:$0xff]
    %v176 = vld [vmem:[#allocation4 + $0x80] sm:$0xff]
    %v177 = vld [vmem:[#allocation4 + $0x88] sm:$0xff]
    %v178 = vld [vmem:[#allocation4 + $0x90] sm:$0xff]
    %v179 = vld [vmem:[#allocation4 + $0x98] sm:$0xff]
    %v180 = vld [vmem:[#allocation4 + $0xa0] sm:$0xff]
    %v181 = vld [vmem:[#allocation4 + $0xa8] sm:$0xff]
    %v182 = vld [vmem:[#allocation4 + $0xb0] sm:$0xff]
    %v183 = vld [vmem:[#allocation4 + $0xb8] sm:$0xff]
    %v184 = vld [vmem:[#allocation4 + $0xc0] sm:$0xff]
    %v185 = vld [vmem:[#allocation4 + $0xc8] sm:$0xff]
    %v186 = vld [vmem:[#allocation4 + $0xd0] sm:$0xff]
    %v187 = vld [vmem:[#allocation4 + $0xd8] sm:$0xff]
    %v188 = vld [vmem:[#allocation4 + $0xe0] sm:$0xff]
    %v189 = vld [vmem:[#allocation4 + $0xe8] sm:$0xff]
    %v190 = vld [vmem:[#allocation4 + $0xf0] sm:$0xff]
    %v191 = vld [vmem:[#allocation4 + $0xf8] sm:$0xff]
    %v192 = vld [vmem:[#allocation4 + $0x100] sm:$0xff]
    %v193 = vld [vmem:[#allocation4 + $0x108] sm:$0xff]
    %v194 = vld [vmem:[#allocation4 + $0x110] sm:$0xff]
    %v195 = vld [vmem:[#allocation4 + $0x118] sm:$0xff]
    %v196 = vld [vmem:[#allocation4 + $0x120] sm:$0xff]
    %v197 = vld [vmem:[#allocation4 + $0x128] sm:$0xff]
    %v198 = vld [vmem:[#allocation4 + $0x130] sm:$0xff]
    %v199 = vld [vmem:[#allocation4 + $0x138] sm:$0xff]
    %v200 = vld [vmem:[#allocation4 + $0x140] sm:$0xff]
    %v201 = vld [vmem:[#allocation4 + $0x148] sm:$0xff]
    %v202 = vld [vmem:[#allocation4 + $0x150] sm:$0xff]
    %v203 = vld [vmem:[#allocation4 + $0x158] sm:$0xff]
    %v204 = vld [vmem:[#allocation4 + $0x160] sm:$0xff]
    %v205 = vld [vmem:[#allocation4 + $0x168] sm:$0xff]
    %v206 = vld [vmem:[#allocation4 + $0x170] sm:$0xff]
    %v207 = vld [vmem:[#allocation4 + $0x178] sm:$0xff]
    %v208 = vld [vmem:[#allocation4 + $0x180] sm:$0xff]
    %v209 = vld [vmem:[#allocation4 + $0x188] sm:$0xff]
    %v210 = vld [vmem:[#allocation4 + $0x190] sm:$0xff]
    %v211 = vld [vmem:[#allocation4 + $0x198] sm:$0xff]
    %v212 = vld [vmem:[#allocation4 + $0x1a0] sm:$0xff]
    %v213 = vld [vmem:[#allocation4 + $0x1a8] sm:$0xff]
    %v214 = vld [vmem:[#allocation4 + $0x1b0] sm:$0xff]
    %v215 = vld [vmem:[#allocation4 + $0x1b8] sm:$0xff]
    %v216 = vld [vmem:[#allocation4 + $0x1c0] sm:$0xff]
    %v217 = vld [vmem:[#allocation4 + $0x1c8] sm:$0xff]
    %v218 = vld [vmem:[#allocation4 + $0x1d0] sm:$0xff]
    %v219 = vld [vmem:[#allocation4 + $0x1d8] sm:$0xff]
    %v220 = vld [vmem:[#allocation4 + $0x1e0] sm:$0xff]
    %v221 = vld [vmem:[#allocation4 + $0x1e8] sm:$0xff]
    %v222 = vld [vmem:[#allocation4 + $0x1f0] sm:$0xff]
    %v223 = vld [vmem:[#allocation4 + $0x1f8] sm:$0xff]
    %vm224 = vcmask 523264
    %v226 = vsel %vm224, %v158, 0
    %v229 = vsel %vm224, %v159, 0
    %231 = vmatprep.subr.mxu0 0.0
    %232 = vmatpush1.msra.mxu0 0.0
    %233 = vmatprep.subr.mxu0 0.0
    %234 = vmatpush1.msra.mxu0 0.0
    %235 = vmatprep.subr.mxu0 0.0
    %236 = vmatpush1.msra.mxu0 0.0
    %237 = vmatprep.subr.mxu0 0.0
    %238 = vmatpush1.msra.mxu0 0.0
    %239 = vmatprep.subr.mxu0 0.0
    %240 = vmatpush1.msra.mxu0 0.0
    %241 = vmatprep.subr.mxu0 0.0
    %242 = vmatpush1.msra.mxu0 0.0
    %243 = vmatprep.subr.mxu0 0.0
    %244 = vmatpush1.msra.mxu0 0.0
    %245 = vmatprep.subr.mxu0 0.0
    %246 = vmatpush1.msra.mxu0 0.0
    %247 = vmatprep.subr.mxu0 %v217
    %248 = vmatpush1.msra.mxu0 %v216
    %249 = vmatprep.subr.mxu0 %v209
    %250 = vmatpush1.msra.mxu0 %v208
    %251 = vmatprep.subr.mxu0 %v201
    %252 = vmatpush1.msra.mxu0 %v200
    %253 = vmatprep.subr.mxu0 %v193
    %254 = vmatpush1.msra.mxu0 %v192
    %255 = vmatprep.subr.mxu0 %v185
    %256 = vmatpush1.msra.mxu0 %v184
    %257 = vmatprep.subr.mxu0 %v177
    %258 = vmatpush1.msra.mxu0 %v176
    %259 = vmatprep.subr.mxu0 %v169
    %260 = vmatpush1.msra.mxu0 %v168
    %261 = vmatprep.subr.mxu0 %v161
    %262 = vmatpush1.msra.mxu0 %v160
    %263 = vmatprep.subr.mxu0 0.0
    %264 = vmatpush2.msra.mxu0 0.0
    %265 = vmatprep.subr.mxu0 0.0
    %266 = vmatpush2.msra.mxu0 0.0
    %267 = vmatprep.subr.mxu0 0.0
    %268 = vmatpush2.msra.mxu0 0.0
    %269 = vmatprep.subr.mxu0 0.0
    %270 = vmatpush2.msra.mxu0 0.0
    %271 = vmatprep.subr.mxu0 0.0
    %272 = vmatpush2.msra.mxu0 0.0
    %273 = vmatprep.subr.mxu0 0.0
    %274 = vmatpush2.msra.mxu0 0.0
    %275 = vmatprep.subr.mxu0 0.0
    %276 = vmatpush2.msra.mxu0 0.0
    %277 = vmatprep.subr.mxu0 0.0
    %278 = vmatpush2.msra.mxu0 0.0
    %279 = vmatprep.subr.mxu0 0.0
    %280 = vmatpush2.msra.mxu0 0.0
    %281 = vmatprep.subr.mxu0 0.0
    %282 = vmatpush2.msra.mxu0 0.0
    %283 = vmatprep.subr.mxu0 0.0
    %284 = vmatpush2.msra.mxu0 0.0
    %285 = vmatprep.subr.mxu0 0.0
    %286 = vmatpush2.msra.mxu0 0.0
    %287 = vmatprep.subr.mxu0 0.0
    %288 = vmatpush2.msra.mxu0 0.0
    %289 = vmatprep.subr.mxu0 0.0
    %290 = vmatpush2.msra.mxu0 0.0
    %291 = vmatprep.subr.mxu0 0.0
    %292 = vmatpush2.msra.mxu0 0.0
    %293 = vmatprep.subr.mxu0 0.0
    %294 = vmatpush2.msra.mxu0 0.0
    %295 = vmatprep.mubr.f32.mxu0 0.0
    %296 = vmatmul.mubr.f32.gmra.mxu0 %v226
    %v297 = vpop.f32.mrf.mxu0
    %v298 = vadd.f32 0.0, %v297
    %v299 = vpop.f32.mrf.mxu0
    %v300 = vadd.f32 0.0, %v299
    %301 = vmatprep.mubr.f32.mxu0 0.0
    %302 = vmatmul.mubr.f32.gmra.mxu0 %v229
    %v303 = vpop.f32.mrf.mxu0
    %v304 = vadd.f32 0.0, %v303
    %v305 = vpop.f32.mrf.mxu0
    %v306 = vadd.f32 0.0, %v305
    %307 = vdwg.mxu0
    %308 = vmatprep.subr.mxu0 0.0
    %309 = vmatpush1.msra.mxu0 0.0
    %310 = vmatprep.subr.mxu0 0.0
    %311 = vmatpush1.msra.mxu0 0.0
    %312 = vmatprep.subr.mxu0 0.0
    %313 = vmatpush1.msra.mxu0 0.0
    %314 = vmatprep.subr.mxu0 0.0
    %315 = vmatpush1.msra.mxu0 0.0
    %316 = vmatprep.subr.mxu0 0.0
    %317 = vmatpush1.msra.mxu0 0.0
    %318 = vmatprep.subr.mxu0 0.0
    %319 = vmatpush1.msra.mxu0 0.0
    %320 = vmatprep.subr.mxu0 0.0
    %321 = vmatpush1.msra.mxu0 0.0
    %322 = vmatprep.subr.mxu0 0.0
    %323 = vmatpush1.msra.mxu0 0.0
    %324 = vmatprep.subr.mxu0 %v219
    %325 = vmatpush1.msra.mxu0 %v218
    %326 = vmatprep.subr.mxu0 %v211
    %327 = vmatpush1.msra.mxu0 %v210
    %328 = vmatprep.subr.mxu0 %v203
    %329 = vmatpush1.msra.mxu0 %v202
    %330 = vmatprep.subr.mxu0 %v195
    %331 = vmatpush1.msra.mxu0 %v194
    %332 = vmatprep.subr.mxu0 %v187
    %333 = vmatpush1.msra.mxu0 %v186
    %334 = vmatprep.subr.mxu0 %v179
    %335 = vmatpush1.msra.mxu0 %v178
    %336 = vmatprep.subr.mxu0 %v171
    %337 = vmatpush1.msra.mxu0 %v170
    %338 = vmatprep.subr.mxu0 %v163
    %339 = vmatpush1.msra.mxu0 %v162
    %340 = vmatprep.subr.mxu0 0.0
    %341 = vmatpush2.msra.mxu0 0.0
    %342 = vmatprep.subr.mxu0 0.0
    %343 = vmatpush2.msra.mxu0 0.0
    %344 = vmatprep.subr.mxu0 0.0
    %345 = vmatpush2.msra.mxu0 0.0
    %346 = vmatprep.subr.mxu0 0.0
    %347 = vmatpush2.msra.mxu0 0.0
    %348 = vmatprep.subr.mxu0 0.0
    %349 = vmatpush2.msra.mxu0 0.0
    %350 = vmatprep.subr.mxu0 0.0
    %351 = vmatpush2.msra.mxu0 0.0
    %352 = vmatprep.subr.mxu0 0.0
    %353 = vmatpush2.msra.mxu0 0.0
    %354 = vmatprep.subr.mxu0 0.0
    %355 = vmatpush2.msra.mxu0 0.0
    %356 = vmatprep.subr.mxu0 0.0
    %357 = vmatpush2.msra.mxu0 0.0
    %358 = vmatprep.subr.mxu0 0.0
    %359 = vmatpush2.msra.mxu0 0.0
    %360 = vmatprep.subr.mxu0 0.0
    %361 = vmatpush2.msra.mxu0 0.0
    %362 = vmatprep.subr.mxu0 0.0
    %363 = vmatpush2.msra.mxu0 0.0
    %364 = vmatprep.subr.mxu0 0.0
    %365 = vmatpush2.msra.mxu0 0.0
    %366 = vmatprep.subr.mxu0 0.0
    %367 = vmatpush2.msra.mxu0 0.0
    %368 = vmatprep.subr.mxu0 0.0
    %369 = vmatpush2.msra.mxu0 0.0
    %370 = vmatprep.subr.mxu0 0.0
    %371 = vmatpush2.msra.mxu0 0.0
    %372 = vmatprep.mubr.f32.mxu0 0.0
    %373 = vmatmul.mubr.f32.gmra.mxu0 %v226
    %v374 = vpop.f32.mrf.mxu0
    %v375 = vadd.f32 0.0, %v374
    %v376 = vpop.f32.mrf.mxu0
    %v377 = vadd.f32 0.0, %v376
    %378 = vmatprep.mubr.f32.mxu0 0.0
    %379 = vmatmul.mubr.f32.gmra.mxu0 %v229
    %v380 = vpop.f32.mrf.mxu0
    %v381 = vadd.f32 0.0, %v380
    %v382 = vpop.f32.mrf.mxu0
    %v383 = vadd.f32 0.0, %v382
    %384 = vdwg.mxu0
    %385 = vmatprep.subr.mxu0 0.0
    %386 = vmatpush1.msra.mxu0 0.0
    %387 = vmatprep.subr.mxu0 0.0
    %388 = vmatpush1.msra.mxu0 0.0
    %389 = vmatprep.subr.mxu0 0.0
    %390 = vmatpush1.msra.mxu0 0.0
    %391 = vmatprep.subr.mxu0 0.0
    %392 = vmatpush1.msra.mxu0 0.0
    %393 = vmatprep.subr.mxu0 0.0
    %394 = vmatpush1.msra.mxu0 0.0
    %395 = vmatprep.subr.mxu0 0.0
    %396 = vmatpush1.msra.mxu0 0.0
    %397 = vmatprep.subr.mxu0 0.0
    %398 = vmatpush1.msra.mxu0 0.0
    %399 = vmatprep.subr.mxu0 0.0
    %400 = vmatpush1.msra.mxu0 0.0
    %401 = vmatprep.subr.mxu0 %v221
    %402 = vmatpush1.msra.mxu0 %v220
    %403 = vmatprep.subr.mxu0 %v213
    %404 = vmatpush1.msra.mxu0 %v212
    %405 = vmatprep.subr.mxu0 %v205
    %406 = vmatpush1.msra.mxu0 %v204
    %407 = vmatprep.subr.mxu0 %v197
    %408 = vmatpush1.msra.mxu0 %v196
    %409 = vmatprep.subr.mxu0 %v189
    %410 = vmatpush1.msra.mxu0 %v188
    %411 = vmatprep.subr.mxu0 %v181
    %412 = vmatpush1.msra.mxu0 %v180
    %413 = vmatprep.subr.mxu0 %v173
    %414 = vmatpush1.msra.mxu0 %v172
    %415 = vmatprep.subr.mxu0 %v165
    %416 = vmatpush1.msra.mxu0 %v164
    %417 = vmatprep.subr.mxu0 0.0
    %418 = vmatpush2.msra.mxu0 0.0
    %419 = vmatprep.subr.mxu0 0.0
    %420 = vmatpush2.msra.mxu0 0.0
    %421 = vmatprep.subr.mxu0 0.0
    %422 = vmatpush2.msra.mxu0 0.0
    %423 = vmatprep.subr.mxu0 0.0
    %424 = vmatpush2.msra.mxu0 0.0
    %425 = vmatprep.subr.mxu0 0.0
    %426 = vmatpush2.msra.mxu0 0.0
    %427 = vmatprep.subr.mxu0 0.0
    %428 = vmatpush2.msra.mxu0 0.0
    %429 = vmatprep.subr.mxu0 0.0
    %430 = vmatpush2.msra.mxu0 0.0
    %431 = vmatprep.subr.mxu0 0.0
    %432 = vmatpush2.msra.mxu0 0.0
    %433 = vmatprep.subr.mxu0 0.0
    %434 = vmatpush2.msra.mxu0 0.0
    %435 = vmatprep.subr.mxu0 0.0
    %436 = vmatpush2.msra.mxu0 0.0
    %437 = vmatprep.subr.mxu0 0.0
    %438 = vmatpush2.msra.mxu0 0.0
    %439 = vmatprep.subr.mxu0 0.0
    %440 = vmatpush2.msra.mxu0 0.0
    %441 = vmatprep.subr.mxu0 0.0
    %442 = vmatpush2.msra.mxu0 0.0
    %443 = vmatprep.subr.mxu0 0.0
    %444 = vmatpush2.msra.mxu0 0.0
    %445 = vmatprep.subr.mxu0 0.0
    %446 = vmatpush2.msra.mxu0 0.0
    %447 = vmatprep.subr.mxu0 0.0
    %448 = vmatpush2.msra.mxu0 0.0
    %449 = vmatprep.mubr.f32.mxu0 0.0
    %450 = vmatmul.mubr.f32.gmra.mxu0 %v226
    %v451 = vpop.f32.mrf.mxu0
    %v452 = vadd.f32 0.0, %v451
    %v453 = vpop.f32.mrf.mxu0
    %v454 = vadd.f32 0.0, %v453
    %455 = vmatprep.mubr.f32.mxu0 0.0
    %456 = vmatmul.mubr.f32.gmra.mxu0 %v229
    %v457 = vpop.f32.mrf.mxu0
    %v458 = vadd.f32 0.0, %v457
    %v459 = vpop.f32.mrf.mxu0
    %v460 = vadd.f32 0.0, %v459
    %461 = vdwg.mxu0
    %462 = vmatprep.subr.mxu0 0.0
    %463 = vmatpush1.msra.mxu0 0.0
    %464 = vmatprep.subr.mxu0 0.0
    %465 = vmatpush1.msra.mxu0 0.0
    %466 = vmatprep.subr.mxu0 0.0
    %467 = vmatpush1.msra.mxu0 0.0
    %468 = vmatprep.subr.mxu0 0.0
    %469 = vmatpush1.msra.mxu0 0.0
    %470 = vmatprep.subr.mxu0 0.0
    %471 = vmatpush1.msra.mxu0 0.0
    %472 = vmatprep.subr.mxu0 0.0
    %473 = vmatpush1.msra.mxu0 0.0
    %474 = vmatprep.subr.mxu0 0.0
    %475 = vmatpush1.msra.mxu0 0.0
    %476 = vmatprep.subr.mxu0 0.0
    %477 = vmatpush1.msra.mxu0 0.0
    %478 = vmatprep.subr.mxu0 %v223
    %479 = vmatpush1.msra.mxu0 %v222
    %480 = vmatprep.subr.mxu0 %v215
    %481 = vmatpush1.msra.mxu0 %v214
    %482 = vmatprep.subr.mxu0 %v207
    %483 = vmatpush1.msra.mxu0 %v206
    %484 = vmatprep.subr.mxu0 %v199
    %485 = vmatpush1.msra.mxu0 %v198
    %486 = vmatprep.subr.mxu0 %v191
    %487 = vmatpush1.msra.mxu0 %v190
    %488 = vmatprep.subr.mxu0 %v183
    %489 = vmatpush1.msra.mxu0 %v182
    %490 = vmatprep.subr.mxu0 %v175
    %491 = vmatpush1.msra.mxu0 %v174
    %492 = vmatprep.subr.mxu0 %v167
    %493 = vmatpush1.msra.mxu0 %v166
    %494 = vmatprep.subr.mxu0 0.0
    %495 = vmatpush2.msra.mxu0 0.0
    %496 = vmatprep.subr.mxu0 0.0
    %497 = vmatpush2.msra.mxu0 0.0
    %498 = vmatprep.subr.mxu0 0.0
    %499 = vmatpush2.msra.mxu0 0.0
    %500 = vmatprep.subr.mxu0 0.0
    %501 = vmatpush2.msra.mxu0 0.0
    %502 = vmatprep.subr.mxu0 0.0
    %503 = vmatpush2.msra.mxu0 0.0
    %504 = vmatprep.subr.mxu0 0.0
    %505 = vmatpush2.msra.mxu0 0.0
    %506 = vmatprep.subr.mxu0 0.0
    %507 = vmatpush2.msra.mxu0 0.0
    %508 = vmatprep.subr.mxu0 0.0
    %509 = vmatpush2.msra.mxu0 0.0
    %510 = vmatprep.subr.mxu0 0.0
    %511 = vmatpush2.msra.mxu0 0.0
    %512 = vmatprep.subr.mxu0 0.0
    %513 = vmatpush2.msra.mxu0 0.0
    %514 = vmatprep.subr.mxu0 0.0
    %515 = vmatpush2.msra.mxu0 0.0
    %516 = vmatprep.subr.mxu0 0.0
    %517 = vmatpush2.msra.mxu0 0.0
    %518 = vmatprep.subr.mxu0 0.0
    %519 = vmatpush2.msra.mxu0 0.0
    %520 = vmatprep.subr.mxu0 0.0
    %521 = vmatpush2.msra.mxu0 0.0
    %522 = vmatprep.subr.mxu0 0.0
    %523 = vmatpush2.msra.mxu0 0.0
    %524 = vmatprep.subr.mxu0 0.0
    %525 = vmatpush2.msra.mxu0 0.0
    %526 = vmatprep.mubr.f32.mxu0 0.0
    %527 = vmatmul.mubr.f32.gmra.mxu0 %v226
    %v528 = vpop.f32.mrf.mxu0
    %v529 = vadd.f32 0.0, %v528
    %v530 = vpop.f32.mrf.mxu0
    %v531 = vadd.f32 0.0, %v530
    %532 = vmatprep.mubr.f32.mxu0 0.0
    %533 = vmatmul.mubr.f32.gmra.mxu0 %v229
    %v534 = vpop.f32.mrf.mxu0
    %v535 = vadd.f32 0.0, %v534
    %v536 = vpop.f32.mrf.mxu0
    %v537 = vadd.f32 0.0, %v536
    %538 = vdwg.mxu0
    %v539 = vld [vmem:[%s1] sm:$0xff]
    %v540 = vld [vmem:[%s1 + $0x8] sm:$0xff]
    %v541 = vld [vmem:[%s3] sm:$0x3]
    %v542 = vld [vmem:[#allocation6] sm:$0x1]
    %544 = vset.pattern.permute.xlu0 0
    %545 = vperm.xlu0 %544, %v539
    %v546 = vpop.permute.xlu0 %545
    %549 = vset.pattern.permute.xlu0 0
    %550 = vperm.xlu0 %549, %v540
    %v551 = vpop.permute.xlu0 %550
    %v553 = vlaneseq
    %v554 = vshrl.u32 %v553, 7
    %v555 = vsub.s32 0, %v554
    %v556 = vrot.slane %v541, %v555
    %v557 = vmul.f32 %v546, %v556
    %v558 = vmul.f32 %v551, %v556
    %v560 = vlaneseq
    %v561 = vshrl.u32 %v560, 7
    %v562 = vsub.s32 0, %v561
    %v563 = vrot.slane %v542, %v562
    %v565 = vadd.f32 %v563, %v557
    %v566 = vadd.f32 %v563, %v558
    %567 = vset.pattern.permute.xlu0 1
    %568 = vperm.xlu0 %567, %v539
    %v569 = vpop.permute.xlu0 %568
    %571 = vset.pattern.permute.xlu0 1
    %572 = vperm.xlu0 %571, %v540
    %v573 = vpop.permute.xlu0 %572
    %v575 = vlaneseq
    %v576 = vshrl.u32 %v575, 7
    %v577 = vsub.s32 1, %v576
    %v578 = vrot.slane %v541, %v577
    %v579 = vmul.f32 %v569, %v578
    %v580 = vmul.f32 %v573, %v578
    %v581 = vadd.f32 %v565, %v579
    %v582 = vadd.f32 %v566, %v580
    %v583 = vtanh.pop %v581
    %v584 = vtanh.pop %v582
    %v585 = vld [vmem:[#allocation7] sm:$0xff]
    %v586 = vld [vmem:[#allocation7 + $0x8] sm:$0xff]
    %v587 = vld [vmem:[#allocation7 + $0x10] sm:$0xff]
    %v588 = vld [vmem:[#allocation7 + $0x18] sm:$0xff]
    %v589 = vld [vmem:[#allocation9] sm:$0x1]
    %v591 = vlaneseq
    %v592 = vshrl.u32 %v591, 7
    %v593 = vsub.s32 0, %v592
    %v594 = vrot.slane %v589, %v593
    %vm596 = vcmask 261120
    %v598 = vsel %vm596, %v583, 0
    %v601 = vsel %vm596, %v584, 0
    %603 = vmatprep.subr.mxu0 0.0
    %604 = vmatpush1.msra.mxu0 0.0
    %605 = vmatprep.subr.mxu0 0.0
    %606 = vmatpush1.msra.mxu0 0.0
    %607 = vmatprep.subr.mxu0 0.0
    %608 = vmatpush1.msra.mxu0 0.0
    %609 = vmatprep.subr.mxu0 0.0
    %610 = vmatpush1.msra.mxu0 0.0
    %611 = vmatprep.subr.mxu0 0.0
    %612 = vmatpush1.msra.mxu0 0.0
    %613 = vmatprep.subr.mxu0 0.0
    %614 = vmatpush1.msra.mxu0 0.0
    %615 = vmatprep.subr.mxu0 0.0
    %616 = vmatpush1.msra.mxu0 0.0
    %617 = vmatprep.subr.mxu0 0.0
    %618 = vmatpush1.msra.mxu0 0.0
    %619 = vmatprep.subr.mxu0 0.0
    %620 = vmatpush1.msra.mxu0 0.0
    %621 = vmatprep.subr.mxu0 0.0
    %622 = vmatpush1.msra.mxu0 0.0
    %623 = vmatprep.subr.mxu0 0.0
    %624 = vmatpush1.msra.mxu0 0.0
    %625 = vmatprep.subr.mxu0 0.0
    %626 = vmatpush1.msra.mxu0 0.0
    %627 = vmatprep.subr.mxu0 0.0
    %628 = vmatpush1.msra.mxu0 %v588
    %629 = vmatprep.subr.mxu0 0.0
    %630 = vmatpush1.msra.mxu0 %v587
    %631 = vmatprep.subr.mxu0 0.0
    %632 = vmatpush1.msra.mxu0 %v586
    %633 = vmatprep.subr.mxu0 0.0
    %634 = vmatpush1.msra.mxu0 %v585
    %635 = vmatprep.subr.mxu0 0.0
    %636 = vmatpush2.msra.mxu0 0.0
    %637 = vmatprep.subr.mxu0 0.0
    %638 = vmatpush2.msra.mxu0 0.0
    %639 = vmatprep.subr.mxu0 0.0
    %640 = vmatpush2.msra.mxu0 0.0
    %641 = vmatprep.subr.mxu0 0.0
    %642 = vmatpush2.msra.mxu0 0.0
    %643 = vmatprep.subr.mxu0 0.0
    %644 = vmatpush2.msra.mxu0 0.0
    %645 = vmatprep.subr.mxu0 0.0
    %646 = vmatpush2.msra.mxu0 0.0
    %647 = vmatprep.subr.mxu0 0.0
    %648 = vmatpush2.msra.mxu0 0.0
    %649 = vmatprep.subr.mxu0 0.0
    %650 = vmatpush2.msra.mxu0 0.0
    %651 = vmatprep.subr.mxu0 0.0
    %652 = vmatpush2.msra.mxu0 0.0
    %653 = vmatprep.subr.mxu0 0.0
    %654 = vmatpush2.msra.mxu0 0.0
    %655 = vmatprep.subr.mxu0 0.0
    %656 = vmatpush2.msra.mxu0 0.0
    %657 = vmatprep.subr.mxu0 0.0
    %658 = vmatpush2.msra.mxu0 0.0
    %659 = vmatprep.subr.mxu0 0.0
    %660 = vmatpush2.msra.mxu0 0.0
    %661 = vmatprep.subr.mxu0 0.0
    %662 = vmatpush2.msra.mxu0 0.0
    %663 = vmatprep.subr.mxu0 0.0
    %664 = vmatpush2.msra.mxu0 0.0
    %665 = vmatprep.subr.mxu0 0.0
    %666 = vmatpush2.msra.mxu0 0.0
    %667 = vmatprep.mubr.f32.mxu0 0.0
    %668 = vmatmul.mubr.f32.gmra.mxu0 %v598
    %v669 = vpop.f32.mrf.mxu0
    %v670 = vadd.f32 %v594, %v669
    %v671 = vpop.f32.mrf.mxu0
    %672 = vmatprep.mubr.f32.mxu0 0.0
    %673 = vmatmul.mubr.f32.gmra.mxu0 %v601
    %v674 = vpop.f32.mrf.mxu0
    %v675 = vadd.f32 %v594, %v674
    %v676 = vpop.f32.mrf.mxu0
    %677 = vdwg.mxu0
    %v678 = vtanh.pop %v670
    %v679 = vtanh.pop %v675
    %v680 = vld [vmem:[#allocation10] sm:$0xff]
    %v681 = vld [vmem:[#allocation10 + $0x8] sm:$0xff]
    %v682 = vld [vmem:[#allocation10 + $0x10] sm:$0xff]
    %v683 = vld [vmem:[#allocation10 + $0x18] sm:$0xff]
    %v684 = vld [vmem:[#allocation12] sm:$0x1]
    %v686 = vlaneseq
    %v687 = vshrl.u32 %v686, 7
    %v688 = vsub.s32 0, %v687
    %v689 = vrot.slane %v684, %v688
    %v692 = vsel %vm596, %v678, 0
    %v695 = vsel %vm596, %v679, 0
    %697 = vmatprep.subr.mxu0 0.0
    %698 = vmatpush1.msra.mxu0 0.0
    %699 = vmatprep.subr.mxu0 0.0
    %700 = vmatpush1.msra.mxu0 0.0
    %701 = vmatprep.subr.mxu0 0.0
    %702 = vmatpush1.msra.mxu0 0.0
    %703 = vmatprep.subr.mxu0 0.0
    %704 = vmatpush1.msra.mxu0 0.0
    %705 = vmatprep.subr.mxu0 0.0
    %706 = vmatpush1.msra.mxu0 0.0
    %707 = vmatprep.subr.mxu0 0.0
    %708 = vmatpush1.msra.mxu0 0.0
    %709 = vmatprep.subr.mxu0 0.0
    %710 = vmatpush1.msra.mxu0 0.0
    %711 = vmatprep.subr.mxu0 0.0
    %712 = vmatpush1.msra.mxu0 0.0
    %713 = vmatprep.subr.mxu0 0.0
    %714 = vmatpush1.msra.mxu0 0.0
    %715 = vmatprep.subr.mxu0 0.0
    %716 = vmatpush1.msra.mxu0 0.0
    %717 = vmatprep.subr.mxu0 0.0
    %718 = vmatpush1.msra.mxu0 0.0
    %719 = vmatprep.subr.mxu0 0.0
    %720 = vmatpush1.msra.mxu0 0.0
    %721 = vmatprep.subr.mxu0 0.0
    %722 = vmatpush1.msra.mxu0 %v683
    %723 = vmatprep.subr.mxu0 0.0
    %724 = vmatpush1.msra.mxu0 %v682
    %725 = vmatprep.subr.mxu0 0.0
    %726 = vmatpush1.msra.mxu0 %v681
    %727 = vmatprep.subr.mxu0 0.0
    %728 = vmatpush1.msra.mxu0 %v680
    %729 = vmatprep.subr.mxu0 0.0
    %730 = vmatpush2.msra.mxu0 0.0
    %731 = vmatprep.subr.mxu0 0.0
    %732 = vmatpush2.msra.mxu0 0.0
    %733 = vmatprep.subr.mxu0 0.0
    %734 = vmatpush2.msra.mxu0 0.0
    %735 = vmatprep.subr.mxu0 0.0
    %736 = vmatpush2.msra.mxu0 0.0
    %737 = vmatprep.subr.mxu0 0.0
    %738 = vmatpush2.msra.mxu0 0.0
    %739 = vmatprep.subr.mxu0 0.0
    %740 = vmatpush2.msra.mxu0 0.0
    %741 = vmatprep.subr.mxu0 0.0
    %742 = vmatpush2.msra.mxu0 0.0
    %743 = vmatprep.subr.mxu0 0.0
    %744 = vmatpush2.msra.mxu0 0.0
    %745 = vmatprep.subr.mxu0 0.0
    %746 = vmatpush2.msra.mxu0 0.0
    %747 = vmatprep.subr.mxu0 0.0
    %748 = vmatpush2.msra.mxu0 0.0
    %749 = vmatprep.subr.mxu0 0.0
    %750 = vmatpush2.msra.mxu0 0.0
    %751 = vmatprep.subr.mxu0 0.0
    %752 = vmatpush2.msra.mxu0 0.0
    %753 = vmatprep.subr.mxu0 0.0
    %754 = vmatpush2.msra.mxu0 0.0
    %755 = vmatprep.subr.mxu0 0.0
    %756 = vmatpush2.msra.mxu0 0.0
    %757 = vmatprep.subr.mxu0 0.0
    %758 = vmatpush2.msra.mxu0 0.0
    %759 = vmatprep.subr.mxu0 0.0
    %760 = vmatpush2.msra.mxu0 0.0
    %761 = vmatprep.mubr.f32.mxu0 0.0
    %762 = vmatmul.mubr.f32.gmra.mxu0 %v692
    %v763 = vpop.f32.mrf.mxu0
    %v764 = vadd.f32 %v689, %v763
    %v765 = vpop.f32.mrf.mxu0
    %766 = vmatprep.mubr.f32.mxu0 0.0
    %767 = vmatmul.mubr.f32.gmra.mxu0 %v695
    %v768 = vpop.f32.mrf.mxu0
    %v769 = vadd.f32 %v689, %v768
    %v770 = vpop.f32.mrf.mxu0
    %771 = vdwg.mxu0
    %v772 = vtanh.pop %v764
    %v773 = vtanh.pop %v769
    %v774 = vld [vmem:[%s9] sm:$0xff]
    %v775 = vld [vmem:[%s9 + $0x8] sm:$0xff]
    %v776 = vld [vmem:[%s9 + $0x10] sm:$0xff]
    %v777 = vld [vmem:[%s9 + $0x18] sm:$0xff]
    %v778 = vld [vmem:[%s10] sm:$0x1]
    %v780 = vlaneseq
    %v781 = vshrl.u32 %v780, 7
    %v782 = vsub.s32 0, %v781
    %v783 = vrot.slane %v778, %v782
    %v786 = vsel %vm596, %v772, 0
    %v789 = vsel %vm596, %v773, 0
    %791 = vmatprep.subr.mxu0 0.0
    %792 = vmatpush1.msra.mxu0 0.0
    %793 = vmatprep.subr.mxu0 0.0
    %794 = vmatpush1.msra.mxu0 0.0
    %795 = vmatprep.subr.mxu0 0.0
    %796 = vmatpush1.msra.mxu0 0.0
    %797 = vmatprep.subr.mxu0 0.0
    %798 = vmatpush1.msra.mxu0 0.0
    %799 = vmatprep.subr.mxu0 0.0
    %800 = vmatpush1.msra.mxu0 0.0
    %801 = vmatprep.subr.mxu0 0.0
    %802 = vmatpush1.msra.mxu0 0.0
    %803 = vmatprep.subr.mxu0 0.0
    %804 = vmatpush1.msra.mxu0 0.0
    %805 = vmatprep.subr.mxu0 0.0
    %806 = vmatpush1.msra.mxu0 0.0
    %807 = vmatprep.subr.mxu0 0.0
    %808 = vmatpush1.msra.mxu0 0.0
    %809 = vmatprep.subr.mxu0 0.0
    %810 = vmatpush1.msra.mxu0 0.0
    %811 = vmatprep.subr.mxu0 0.0
    %812 = vmatpush1.msra.mxu0 0.0
    %813 = vmatprep.subr.mxu0 0.0
    %814 = vmatpush1.msra.mxu0 0.0
    %815 = vmatprep.subr.mxu0 0.0
    %816 = vmatpush1.msra.mxu0 %v777
    %817 = vmatprep.subr.mxu0 0.0
    %818 = vmatpush1.msra.mxu0 %v776
    %819 = vmatprep.subr.mxu0 0.0
    %820 = vmatpush1.msra.mxu0 %v775
    %821 = vmatprep.subr.mxu0 0.0
    %822 = vmatpush1.msra.mxu0 %v774
    %823 = vmatprep.subr.mxu0 0.0
    %824 = vmatpush2.msra.mxu0 0.0
    %825 = vmatprep.subr.mxu0 0.0
    %826 = vmatpush2.msra.mxu0 0.0
    %827 = vmatprep.subr.mxu0 0.0
    %828 = vmatpush2.msra.mxu0 0.0
    %829 = vmatprep.subr.mxu0 0.0
    %830 = vmatpush2.msra.mxu0 0.0
    %831 = vmatprep.subr.mxu0 0.0
    %832 = vmatpush2.msra.mxu0 0.0
    %833 = vmatprep.subr.mxu0 0.0
    %834 = vmatpush2.msra.mxu0 0.0
    %835 = vmatprep.subr.mxu0 0.0
    %836 = vmatpush2.msra.mxu0 0.0
    %837 = vmatprep.subr.mxu0 0.0
    %838 = vmatpush2.msra.mxu0 0.0
    %839 = vmatprep.subr.mxu0 0.0
    %840 = vmatpush2.msra.mxu0 0.0
    %841 = vmatprep.subr.mxu0 0.0
    %842 = vmatpush2.msra.mxu0 0.0
    %843 = vmatprep.subr.mxu0 0.0
    %844 = vmatpush2.msra.mxu0 0.0
    %845 = vmatprep.subr.mxu0 0.0
    %846 = vmatpush2.msra.mxu0 0.0
    %847 = vmatprep.subr.mxu0 0.0
    %848 = vmatpush2.msra.mxu0 0.0
    %849 = vmatprep.subr.mxu0 0.0
    %850 = vmatpush2.msra.mxu0 0.0
    %851 = vmatprep.subr.mxu0 0.0
    %852 = vmatpush2.msra.mxu0 0.0
    %853 = vmatprep.subr.mxu0 0.0
    %854 = vmatpush2.msra.mxu0 0.0
    %855 = vmatprep.mubr.f32.mxu0 0.0
    %856 = vmatmul.mubr.f32.gmra.mxu0 %v786
    %v857 = vpop.f32.mrf.mxu0
    %v858 = vadd.f32 %v783, %v857
    %v859 = vpop.f32.mrf.mxu0
    %860 = vmatprep.mubr.f32.mxu0 0.0
    %861 = vmatmul.mubr.f32.gmra.mxu0 %v789
    %v862 = vpop.f32.mrf.mxu0
    %v863 = vadd.f32 %v783, %v862
    %v864 = vpop.f32.mrf.mxu0
    %865 = vdwg.mxu0
    %v866 = vtanh.pop %v858
    %v867 = vtanh.pop %v863
    %v868 = vld [vmem:[#allocation13] sm:$0xff]
    %v869 = vld [vmem:[#allocation13 + $0x8] sm:$0xff]
    %v870 = vld [vmem:[#allocation13 + $0x10] sm:$0xff]
    %v871 = vld [vmem:[#allocation13 + $0x18] sm:$0xff]
    %v872 = vld [vmem:[#allocation13 + $0x20] sm:$0xff]
    %v873 = vld [vmem:[#allocation13 + $0x28] sm:$0xff]
    %v874 = vld [vmem:[#allocation13 + $0x30] sm:$0xff]
    %v875 = vld [vmem:[#allocation13 + $0x38] sm:$0xff]
    %v876 = vld [vmem:[#allocation13 + $0x40] sm:$0xff]
    %v877 = vld [vmem:[#allocation13 + $0x48] sm:$0xff]
    %v878 = vld [vmem:[#allocation13 + $0x50] sm:$0xff]
    %v879 = vld [vmem:[#allocation13 + $0x58] sm:$0xff]
    %v880 = vld [vmem:[#allocation13 + $0x60] sm:$0xff]
    %v881 = vld [vmem:[#allocation13 + $0x68] sm:$0xff]
    %v882 = vld [vmem:[#allocation13 + $0x70] sm:$0xff]
    %v883 = vld [vmem:[#allocation13 + $0x78] sm:$0xff]
    %v884 = vld [vmem:[#allocation13 + $0x80] sm:$0xff]
    %v885 = vld [vmem:[#allocation13 + $0x88] sm:$0xff]
    %v886 = vld [vmem:[#allocation13 + $0x90] sm:$0xff]
    %v887 = vld [vmem:[#allocation13 + $0x98] sm:$0xff]
    %v888 = vld [vmem:[#allocation13 + $0xa0] sm:$0xff]
    %v889 = vld [vmem:[#allocation13 + $0xa8] sm:$0xff]
    %v890 = vld [vmem:[#allocation13 + $0xb0] sm:$0xff]
    %v891 = vld [vmem:[#allocation13 + $0xb8] sm:$0xff]
    %v892 = vld [vmem:[#allocation13 + $0xc0] sm:$0xff]
    %v893 = vld [vmem:[#allocation13 + $0xc8] sm:$0xff]
    %v894 = vld [vmem:[#allocation13 + $0xd0] sm:$0xff]
    %v895 = vld [vmem:[#allocation13 + $0xd8] sm:$0xff]
    %v896 = vld [vmem:[#allocation13 + $0xe0] sm:$0xff]
    %v897 = vld [vmem:[#allocation13 + $0xe8] sm:$0xff]
    %v898 = vld [vmem:[#allocation13 + $0xf0] sm:$0xff]
    %v899 = vld [vmem:[#allocation13 + $0xf8] sm:$0xff]
    %v900 = vld [vmem:[#allocation15] sm:$0xff]
    %v902 = vlaneseq
    %v903 = vshrl.u32 %v902, 7
    %v904 = vsub.s32 0, %v903
    %v905 = vrot.slane %v900, %v904
    %v906 = vlaneseq
    %v907 = vshrl.u32 %v906, 7
    %v908 = vsub.s32 1, %v907
    %v909 = vrot.slane %v900, %v908
    %v910 = vlaneseq
    %v911 = vshrl.u32 %v910, 7
    %v912 = vsub.s32 2, %v911
    %v913 = vrot.slane %v900, %v912
    %v914 = vlaneseq
    %v915 = vshrl.u32 %v914, 7
    %v916 = vsub.s32 3, %v915
    %v917 = vrot.slane %v900, %v916
    %v918 = vlaneseq
    %v919 = vshrl.u32 %v918, 7
    %v920 = vsub.s32 4, %v919
    %v921 = vrot.slane %v900, %v920
    %v922 = vlaneseq
    %v923 = vshrl.u32 %v922, 7
    %v924 = vsub.s32 5, %v923
    %v925 = vrot.slane %v900, %v924
    %v926 = vlaneseq
    %v927 = vshrl.u32 %v926, 7
    %v928 = vsub.s32 6, %v927
    %v929 = vrot.slane %v900, %v928
    %v930 = vlaneseq
    %v931 = vshrl.u32 %v930, 7
    %v932 = vsub.s32 7, %v931
    %v933 = vrot.slane %v900, %v932
    %v943 = vsel %vm596, %v866, 0
    %v946 = vsel %vm596, %v867, 0
    %948 = vmatprep.subr.mxu0 0.0
    %949 = vmatpush1.msra.mxu0 0.0
    %950 = vmatprep.subr.mxu0 0.0
    %951 = vmatpush1.msra.mxu0 0.0
    %952 = vmatprep.subr.mxu0 0.0
    %953 = vmatpush1.msra.mxu0 0.0
    %954 = vmatprep.subr.mxu0 0.0
    %955 = vmatpush1.msra.mxu0 0.0
    %956 = vmatprep.subr.mxu0 0.0
    %957 = vmatpush1.msra.mxu0 0.0
    %958 = vmatprep.subr.mxu0 0.0
    %959 = vmatpush1.msra.mxu0 0.0
    %960 = vmatprep.subr.mxu0 0.0
    %961 = vmatpush1.msra.mxu0 0.0
    %962 = vmatprep.subr.mxu0 0.0
    %963 = vmatpush1.msra.mxu0 0.0
    %964 = vmatprep.subr.mxu0 0.0
    %965 = vmatpush1.msra.mxu0 0.0
    %966 = vmatprep.subr.mxu0 0.0
    %967 = vmatpush1.msra.mxu0 0.0
    %968 = vmatprep.subr.mxu0 0.0
    %969 = vmatpush1.msra.mxu0 0.0
    %970 = vmatprep.subr.mxu0 0.0
    %971 = vmatpush1.msra.mxu0 0.0
    %972 = vmatprep.subr.mxu0 %v893
    %973 = vmatpush1.msra.mxu0 %v892
    %974 = vmatprep.subr.mxu0 %v885
    %975 = vmatpush1.msra.mxu0 %v884
    %976 = vmatprep.subr.mxu0 %v877
    %977 = vmatpush1.msra.mxu0 %v876
    %978 = vmatprep.subr.mxu0 %v869
    %979 = vmatpush1.msra.mxu0 %v868
    %980 = vmatprep.subr.mxu0 0.0
    %981 = vmatpush2.msra.mxu0 0.0
    %982 = vmatprep.subr.mxu0 0.0
    %983 = vmatpush2.msra.mxu0 0.0
    %984 = vmatprep.subr.mxu0 0.0
    %985 = vmatpush2.msra.mxu0 0.0
    %986 = vmatprep.subr.mxu0 0.0
    %987 = vmatpush2.msra.mxu0 0.0
    %988 = vmatprep.subr.mxu0 0.0
    %989 = vmatpush2.msra.mxu0 0.0
    %990 = vmatprep.subr.mxu0 0.0
    %991 = vmatpush2.msra.mxu0 0.0
    %992 = vmatprep.subr.mxu0 0.0
    %993 = vmatpush2.msra.mxu0 0.0
    %994 = vmatprep.subr.mxu0 0.0
    %995 = vmatpush2.msra.mxu0 0.0
    %996 = vmatprep.subr.mxu0 0.0
    %997 = vmatpush2.msra.mxu0 0.0
    %998 = vmatprep.subr.mxu0 0.0
    %999 = vmatpush2.msra.mxu0 0.0
    %1000 = vmatprep.subr.mxu0 0.0
    %1001 = vmatpush2.msra.mxu0 0.0
    %1002 = vmatprep.subr.mxu0 0.0
    %1003 = vmatpush2.msra.mxu0 0.0
    %1004 = vmatprep.subr.mxu0 0.0
    %1005 = vmatpush2.msra.mxu0 0.0
    %1006 = vmatprep.subr.mxu0 0.0
    %1007 = vmatpush2.msra.mxu0 0.0
    %1008 = vmatprep.subr.mxu0 0.0
    %1009 = vmatpush2.msra.mxu0 0.0
    %1010 = vmatprep.subr.mxu0 0.0
    %1011 = vmatpush2.msra.mxu0 0.0
    %1012 = vmatprep.mubr.f32.mxu0 0.0
    %1013 = vmatmul.mubr.f32.gmra.mxu0 %v943
    %v1014 = vpop.f32.mrf.mxu0
    %v1015 = vadd.f32 %v905, %v1014
    %v1016 = vpop.f32.mrf.mxu0
    %v1017 = vadd.f32 %v909, %v1016
    %1018 = vmatprep.mubr.f32.mxu0 0.0
    %1019 = vmatmul.mubr.f32.gmra.mxu0 %v946
    %v1020 = vpop.f32.mrf.mxu0
    %v1021 = vadd.f32 %v905, %v1020
    %v1022 = vpop.f32.mrf.mxu0
    %v1023 = vadd.f32 %v909, %v1022
    %1024 = vdwg.mxu0
    %1025 = vmatprep.subr.mxu0 0.0
    %1026 = vmatpush1.msra.mxu0 0.0
    %1027 = vmatprep.subr.mxu0 0.0
    %1028 = vmatpush1.msra.mxu0 0.0
    %1029 = vmatprep.subr.mxu0 0.0
    %1030 = vmatpush1.msra.mxu0 0.0
    %1031 = vmatprep.subr.mxu0 0.0
    %1032 = vmatpush1.msra.mxu0 0.0
    %1033 = vmatprep.subr.mxu0 0.0
    %1034 = vmatpush1.msra.mxu0 0.0
    %1035 = vmatprep.subr.mxu0 0.0
    %1036 = vmatpush1.msra.mxu0 0.0
    %1037 = vmatprep.subr.mxu0 0.0
    %1038 = vmatpush1.msra.mxu0 0.0
    %1039 = vmatprep.subr.mxu0 0.0
    %1040 = vmatpush1.msra.mxu0 0.0
    %1041 = vmatprep.subr.mxu0 0.0
    %1042 = vmatpush1.msra.mxu0 0.0
    %1043 = vmatprep.subr.mxu0 0.0
    %1044 = vmatpush1.msra.mxu0 0.0
    %1045 = vmatprep.subr.mxu0 0.0
    %1046 = vmatpush1.msra.mxu0 0.0
    %1047 = vmatprep.subr.mxu0 0.0
    %1048 = vmatpush1.msra.mxu0 0.0
    %1049 = vmatprep.subr.mxu0 %v895
    %1050 = vmatpush1.msra.mxu0 %v894
    %1051 = vmatprep.subr.mxu0 %v887
    %1052 = vmatpush1.msra.mxu0 %v886
    %1053 = vmatprep.subr.mxu0 %v879
    %1054 = vmatpush1.msra.mxu0 %v878
    %1055 = vmatprep.subr.mxu0 %v871
    %1056 = vmatpush1.msra.mxu0 %v870
    %1057 = vmatprep.subr.mxu0 0.0
    %1058 = vmatpush2.msra.mxu0 0.0
    %1059 = vmatprep.subr.mxu0 0.0
    %1060 = vmatpush2.msra.mxu0 0.0
    %1061 = vmatprep.subr.mxu0 0.0
    %1062 = vmatpush2.msra.mxu0 0.0
    %1063 = vmatprep.subr.mxu0 0.0
    %1064 = vmatpush2.msra.mxu0 0.0
    %1065 = vmatprep.subr.mxu0 0.0
    %1066 = vmatpush2.msra.mxu0 0.0
    %1067 = vmatprep.subr.mxu0 0.0
    %1068 = vmatpush2.msra.mxu0 0.0
    %1069 = vmatprep.subr.mxu0 0.0
    %1070 = vmatpush2.msra.mxu0 0.0
    %1071 = vmatprep.subr.mxu0 0.0
    %1072 = vmatpush2.msra.mxu0 0.0
    %1073 = vmatprep.subr.mxu0 0.0
    %1074 = vmatpush2.msra.mxu0 0.0
    %1075 = vmatprep.subr.mxu0 0.0
    %1076 = vmatpush2.msra.mxu0 0.0
    %1077 = vmatprep.subr.mxu0 0.0
    %1078 = vmatpush2.msra.mxu0 0.0
    %1079 = vmatprep.subr.mxu0 0.0
    %1080 = vmatpush2.msra.mxu0 0.0
    %1081 = vmatprep.subr.mxu0 0.0
    %1082 = vmatpush2.msra.mxu0 0.0
    %1083 = vmatprep.subr.mxu0 0.0
    %1084 = vmatpush2.msra.mxu0 0.0
    %1085 = vmatprep.subr.mxu0 0.0
    %1086 = vmatpush2.msra.mxu0 0.0
    %1087 = vmatprep.subr.mxu0 0.0
    %1088 = vmatpush2.msra.mxu0 0.0
    %1089 = vmatprep.mubr.f32.mxu0 0.0
    %1090 = vmatmul.mubr.f32.gmra.mxu0 %v943
    %v1091 = vpop.f32.mrf.mxu0
    %v1092 = vadd.f32 %v913, %v1091
    %v1093 = vpop.f32.mrf.mxu0
    %v1094 = vadd.f32 %v917, %v1093
    %1095 = vmatprep.mubr.f32.mxu0 0.0
    %1096 = vmatmul.mubr.f32.gmra.mxu0 %v946
    %v1097 = vpop.f32.mrf.mxu0
    %v1098 = vadd.f32 %v913, %v1097
    %v1099 = vpop.f32.mrf.mxu0
    %v1100 = vadd.f32 %v917, %v1099
    %1101 = vdwg.mxu0
    %1102 = vmatprep.subr.mxu0 0.0
    %1103 = vmatpush1.msra.mxu0 0.0
    %1104 = vmatprep.subr.mxu0 0.0
    %1105 = vmatpush1.msra.mxu0 0.0
    %1106 = vmatprep.subr.mxu0 0.0
    %1107 = vmatpush1.msra.mxu0 0.0
    %1108 = vmatprep.subr.mxu0 0.0
    %1109 = vmatpush1.msra.mxu0 0.0
    %1110 = vmatprep.subr.mxu0 0.0
    %1111 = vmatpush1.msra.mxu0 0.0
    %1112 = vmatprep.subr.mxu0 0.0
    %1113 = vmatpush1.msra.mxu0 0.0
    %1114 = vmatprep.subr.mxu0 0.0
    %1115 = vmatpush1.msra.mxu0 0.0
    %1116 = vmatprep.subr.mxu0 0.0
    %1117 = vmatpush1.msra.mxu0 0.0
    %1118 = vmatprep.subr.mxu0 0.0
    %1119 = vmatpush1.msra.mxu0 0.0
    %1120 = vmatprep.subr.mxu0 0.0
    %1121 = vmatpush1.msra.mxu0 0.0
    %1122 = vmatprep.subr.mxu0 0.0
    %1123 = vmatpush1.msra.mxu0 0.0
    %1124 = vmatprep.subr.mxu0 0.0
    %1125 = vmatpush1.msra.mxu0 0.0
    %1126 = vmatprep.subr.mxu0 %v897
    %1127 = vmatpush1.msra.mxu0 %v896
    %1128 = vmatprep.subr.mxu0 %v889
    %1129 = vmatpush1.msra.mxu0 %v888
    %1130 = vmatprep.subr.mxu0 %v881
    %1131 = vmatpush1.msra.mxu0 %v880
    %1132 = vmatprep.subr.mxu0 %v873
    %1133 = vmatpush1.msra.mxu0 %v872
    %1134 = vmatprep.subr.mxu0 0.0
    %1135 = vmatpush2.msra.mxu0 0.0
    %1136 = vmatprep.subr.mxu0 0.0
    %1137 = vmatpush2.msra.mxu0 0.0
    %1138 = vmatprep.subr.mxu0 0.0
    %1139 = vmatpush2.msra.mxu0 0.0
    %1140 = vmatprep.subr.mxu0 0.0
    %1141 = vmatpush2.msra.mxu0 0.0
    %1142 = vmatprep.subr.mxu0 0.0
    %1143 = vmatpush2.msra.mxu0 0.0
    %1144 = vmatprep.subr.mxu0 0.0
    %1145 = vmatpush2.msra.mxu0 0.0
    %1146 = vmatprep.subr.mxu0 0.0
    %1147 = vmatpush2.msra.mxu0 0.0
    %1148 = vmatprep.subr.mxu0 0.0
    %1149 = vmatpush2.msra.mxu0 0.0
    %1150 = vmatprep.subr.mxu0 0.0
    %1151 = vmatpush2.msra.mxu0 0.0
    %1152 = vmatprep.subr.mxu0 0.0
    %1153 = vmatpush2.msra.mxu0 0.0
    %1154 = vmatprep.subr.mxu0 0.0
    %1155 = vmatpush2.msra.mxu0 0.0
    %1156 = vmatprep.subr.mxu0 0.0
    %1157 = vmatpush2.msra.mxu0 0.0
    %1158 = vmatprep.subr.mxu0 0.0
    %1159 = vmatpush2.msra.mxu0 0.0
    %1160 = vmatprep.subr.mxu0 0.0
    %1161 = vmatpush2.msra.mxu0 0.0
    %1162 = vmatprep.subr.mxu0 0.0
    %1163 = vmatpush2.msra.mxu0 0.0
    %1164 = vmatprep.subr.mxu0 0.0
    %1165 = vmatpush2.msra.mxu0 0.0
    %1166 = vmatprep.mubr.f32.mxu0 0.0
    %1167 = vmatmul.mubr.f32.gmra.mxu0 %v943
    %v1168 = vpop.f32.mrf.mxu0
    %v1169 = vadd.f32 %v921, %v1168
    %v1170 = vpop.f32.mrf.mxu0
    %v1171 = vadd.f32 %v925, %v1170
    %1172 = vmatprep.mubr.f32.mxu0 0.0
    %1173 = vmatmul.mubr.f32.gmra.mxu0 %v946
    %v1174 = vpop.f32.mrf.mxu0
    %v1175 = vadd.f32 %v921, %v1174
    %v1176 = vpop.f32.mrf.mxu0
    %v1177 = vadd.f32 %v925, %v1176
    %1178 = vdwg.mxu0
    %1179 = vmatprep.subr.mxu0 0.0
    %1180 = vmatpush1.msra.mxu0 0.0
    %1181 = vmatprep.subr.mxu0 0.0
    %1182 = vmatpush1.msra.mxu0 0.0
    %1183 = vmatprep.subr.mxu0 0.0
    %1184 = vmatpush1.msra.mxu0 0.0
    %1185 = vmatprep.subr.mxu0 0.0
    %1186 = vmatpush1.msra.mxu0 0.0
    %1187 = vmatprep.subr.mxu0 0.0
    %1188 = vmatpush1.msra.mxu0 0.0
    %1189 = vmatprep.subr.mxu0 0.0
    %1190 = vmatpush1.msra.mxu0 0.0
    %1191 = vmatprep.subr.mxu0 0.0
    %1192 = vmatpush1.msra.mxu0 0.0
    %1193 = vmatprep.subr.mxu0 0.0
    %1194 = vmatpush1.msra.mxu0 0.0
    %1195 = vmatprep.subr.mxu0 0.0
    %1196 = vmatpush1.msra.mxu0 0.0
    %1197 = vmatprep.subr.mxu0 0.0
    %1198 = vmatpush1.msra.mxu0 0.0
    %1199 = vmatprep.subr.mxu0 0.0
    %1200 = vmatpush1.msra.mxu0 0.0
    %1201 = vmatprep.subr.mxu0 0.0
    %1202 = vmatpush1.msra.mxu0 0.0
    %1203 = vmatprep.subr.mxu0 %v899
    %1204 = vmatpush1.msra.mxu0 %v898
    %1205 = vmatprep.subr.mxu0 %v891
    %1206 = vmatpush1.msra.mxu0 %v890
    %1207 = vmatprep.subr.mxu0 %v883
    %1208 = vmatpush1.msra.mxu0 %v882
    %1209 = vmatprep.subr.mxu0 %v875
    %1210 = vmatpush1.msra.mxu0 %v874
    %1211 = vmatprep.subr.mxu0 0.0
    %1212 = vmatpush2.msra.mxu0 0.0
    %1213 = vmatprep.subr.mxu0 0.0
    %1214 = vmatpush2.msra.mxu0 0.0
    %1215 = vmatprep.subr.mxu0 0.0
    %1216 = vmatpush2.msra.mxu0 0.0
    %1217 = vmatprep.subr.mxu0 0.0
    %1218 = vmatpush2.msra.mxu0 0.0
    %1219 = vmatprep.subr.mxu0 0.0
    %1220 = vmatpush2.msra.mxu0 0.0
    %1221 = vmatprep.subr.mxu0 0.0
    %1222 = vmatpush2.msra.mxu0 0.0
    %1223 = vmatprep.subr.mxu0 0.0
    %1224 = vmatpush2.msra.mxu0 0.0
    %1225 = vmatprep.subr.mxu0 0.0
    %1226 = vmatpush2.msra.mxu0 0.0
    %1227 = vmatprep.subr.mxu0 0.0
    %1228 = vmatpush2.msra.mxu0 0.0
    %1229 = vmatprep.subr.mxu0 0.0
    %1230 = vmatpush2.msra.mxu0 0.0
    %1231 = vmatprep.subr.mxu0 0.0
    %1232 = vmatpush2.msra.mxu0 0.0
    %1233 = vmatprep.subr.mxu0 0.0
    %1234 = vmatpush2.msra.mxu0 0.0
    %1235 = vmatprep.subr.mxu0 0.0
    %1236 = vmatpush2.msra.mxu0 0.0
    %1237 = vmatprep.subr.mxu0 0.0
    %1238 = vmatpush2.msra.mxu0 0.0
    %1239 = vmatprep.subr.mxu0 0.0
    %1240 = vmatpush2.msra.mxu0 0.0
    %1241 = vmatprep.subr.mxu0 0.0
    %1242 = vmatpush2.msra.mxu0 0.0
    %1243 = vmatprep.mubr.f32.mxu0 0.0
    %1244 = vmatmul.mubr.f32.gmra.mxu0 %v943
    %v1245 = vpop.f32.mrf.mxu0
    %v1246 = vadd.f32 %v929, %v1245
    %v1247 = vpop.f32.mrf.mxu0
    %v1248 = vadd.f32 %v933, %v1247
    %1249 = vmatprep.mubr.f32.mxu0 0.0
    %1250 = vmatmul.mubr.f32.gmra.mxu0 %v946
    %v1251 = vpop.f32.mrf.mxu0
    %v1252 = vadd.f32 %v929, %v1251
    %v1253 = vpop.f32.mrf.mxu0
    %v1254 = vadd.f32 %v933, %v1253
    %1255 = vdwg.mxu0
    %v1256 = vmul.f32 %v298, %v1015
    %v1257 = vmul.f32 %v300, %v1017
    %v1258 = vmul.f32 %v375, %v1092
    %v1259 = vmul.f32 %v377, %v1094
    %v1260 = vmul.f32 %v452, %v1169
    %v1261 = vmul.f32 %v454, %v1171
    %v1262 = vmul.f32 %v529, %v1246
    %v1263 = vmul.f32 %v531, %v1248
    %v1264 = vmul.f32 %v304, %v1021
    %v1265 = vmul.f32 %v306, %v1023
    %v1266 = vmul.f32 %v381, %v1098
    %v1267 = vmul.f32 %v383, %v1100
    %v1268 = vmul.f32 %v458, %v1175
    %v1269 = vmul.f32 %v460, %v1177
    %v1270 = vmul.f32 %v535, %v1252
    %v1271 = vmul.f32 %v537, %v1254
    %v1272 = vadd.f32 %v1256, %v1257
    %v1273 = vadd.f32 %v1272, %v1258
    %v1274 = vadd.f32 %v1273, %v1259
    %v1275 = vadd.f32 %v1274, %v1260
    %v1276 = vadd.f32 %v1275, %v1261
    %v1277 = vadd.f32 %v1276, %v1262
    %v1278 = vadd.f32 %v1277, %v1263
    %1279 = vadd.xlane.f32.xlu0 %v1278
    %v1280 = vpop.xlane.xlu0 %1279
    %v1281 = vadd.f32 %v1264, %v1265
    %v1282 = vadd.f32 %v1281, %v1266
    %v1283 = vadd.f32 %v1282, %v1267
    %v1284 = vadd.f32 %v1283, %v1268
    %v1285 = vadd.f32 %v1284, %v1269
    %v1286 = vadd.f32 %v1285, %v1270
    %v1287 = vadd.f32 %v1286, %v1271
    %1288 = vadd.xlane.f32.xlu0 %v1287
    %v1289 = vpop.xlane.xlu0 %1288
    %vm1290 = vcmask 7168
    %1291 = vst.msk [vmem:[%s13] sm:$0xff] %vm1290, %v1280
    %1292 = vst.msk [vmem:[%s13 + $0x8] sm:$0xff] %vm1290, %v1289
    // Predicated region
    $region90: #{tpu_custom_call.1} parent=1 // pred_check
      _
    $region91: #{tpu_custom_call.1} parent=1 // pred_check_branch
      %1294 = sbr.rel (0) target = $region93
    $region92: #{tpu_custom_call.1} parent=1 // pred_region
      _
    $region93: #{tpu_custom_call.1} parent=1 // pred_fallthru
      _
    // Predicated region
    $region94: #{tpu_custom_call.1} parent=1 // pred_check
      _
    $region95: #{tpu_custom_call.1} parent=1 // pred_check_branch
      %1296 = sbr.rel (0) target = $region97
    $region96: #{tpu_custom_call.1} parent=1 // pred_region
      _
    $region97: #{tpu_custom_call.1} parent=1 // pred_fallthru
      _
    %1297 = vsyncpa [#allocation3], 1
    %1298 = vsyncpa [#allocation5], 1
    %1299 = vsyncpa [#allocation8], 1
    %1300 = vsyncpa [#allocation11], 1
    %1301 = vsyncpa [#allocation14], 1

</llo_original>
